<compile_context>
chip_gen: v5e
topology: v5e:2x2
jax: 0.10.0
libtpu: 0.0.40
codegen_flags: <defaults>
</compile_context>

<pallas_src>
import math

import jax
import jax.numpy as jnp
from jax.experimental import pallas as pl
from jax.experimental.pallas import tpu as pltpu


def encoder_block_kernel(
    v_ref, k_ref, q_ref, mask_ref,                       # (B,Sv,E) (B,Sk,E) (B,Sq,E) (B,Sq,Sk)
    wq_ref, wk_ref, wv_ref, wfc_ref,                     # block-diag (E,E) bf16 x3, (H,D,E) bf16
    ln1g_ref, ln1b_ref, ln2g_ref, ln2b_ref,              # (1,E) f32
    w1_ref, b1_ref, w2_ref, b2_ref,                      # (E,Hff) bf16, (1,Hff) f32, (Hff,E) bf16, (1,E) f32
    out_ref, attn_ref,                                   # (B,Sq,E) f32, (B,H,Sq,Sk) f32
):
    B, Sq, E = q_ref.shape
    Sk = k_ref.shape[1]
    H = attn_ref.shape[1]
    D = E // H
    f32 = jnp.float32
    bf16 = jnp.bfloat16
    inv_sqrt_d = jnp.float32(1.0 / math.sqrt(D))
    neg_fill = jnp.float32(-1e4) * inv_sqrt_d            # == masked_fill(-1e4) then /sqrt(D)

    # ---- fused head projections: one big 2-D matmul per Q/K/V (bf16 operands, f32 acc) ----
    q2 = q_ref[...].reshape(B * Sq, E)
    k2 = k_ref[...].reshape(B * Sk, E)
    v2 = v_ref[...].reshape(B * Sk, E)                   # Sv == Sk (required by attention)

    qp = jnp.dot(q2.astype(bf16), wq_ref[...], preferred_element_type=f32).reshape(B, Sq, E)
    kp = jnp.dot(k2.astype(bf16), wk_ref[...], preferred_element_type=f32).reshape(B, Sk, E)
    vp = jnp.dot(v2.astype(bf16), wv_ref[...], preferred_element_type=f32).reshape(B, Sk, E)

    mask0 = mask_ref[...] == 0                           # computed once, reused per head

    # ---- per-head attention (batched over B inside each einsum); fc_out fused as accumulation ----
    attn_out = jnp.zeros((B * Sq, E), f32)
    for h in range(H):
        sl = slice(h * D, (h + 1) * D)
        qh = qp[:, :, sl].astype(bf16)                   # (B, Sq, D)
        kh = kp[:, :, sl].astype(bf16)                   # (B, Sk, D)
        vh = vp[:, :, sl].astype(bf16)                   # (B, Sk, D)

        # contract last dims directly -> no kh transpose materialized
        energy = jnp.einsum("bqd,bkd->bqk", qh, kh, preferred_element_type=f32)
        scaled = jnp.where(mask0, neg_fill, energy * inv_sqrt_d)

        m = jnp.max(scaled, axis=-1, keepdims=True)
        p = jnp.exp(scaled - m)
        attn = p * pl.reciprocal(jnp.sum(p, axis=-1, keepdims=True))   # exact reciprocal

        attn_ref[:, h, :, :] = attn.astype(attn_ref.dtype)

        ctx = jnp.einsum("bqk,bkd->bqd", attn.astype(bf16), vh, preferred_element_type=f32)
        attn_out = attn_out + jnp.dot(
            ctx.reshape(B * Sq, D).astype(bf16), wfc_ref[h], preferred_element_type=f32)

    # ---- LayerNorm + residual + FFN, all on the flattened (B*Sq, E) slab ----
    def layernorm(x, g, b):
        mu = jnp.mean(x, axis=-1, keepdims=True)
        var = jnp.mean((x - mu) ** 2, axis=-1, keepdims=True)
        return (x - mu) * jax.lax.rsqrt(var + jnp.float32(1e-5)) * g + b

    # TODO(synk): nn.Dropout treated as identity (inference / eval mode).
    x = layernorm(attn_out, ln1g_ref[...], ln1b_ref[...]) + q2

    hdn = jnp.dot(x.astype(bf16), w1_ref[...], preferred_element_type=f32) + b1_ref[...]
    hdn = jnp.maximum(hdn, jnp.float32(0.0))
    ff = jnp.dot(hdn.astype(bf16), w2_ref[...], preferred_element_type=f32) + b2_ref[...]

    out = layernorm(ff, ln2g_ref[...], ln2b_ref[...]) + x
    out_ref[...] = out.reshape(B, Sq, E).astype(out_ref.dtype)


def encoder_block(values, keys, query, mask, params, heads, b_tile=None):
    N, Sq, E = query.shape
    Sk = keys.shape[1]
    Sv = values.shape[1]
    assert Sv == Sk, "attention contraction requires value_len == key_len"
    D = E // heads
    Hff = params["W1"].shape[0]

    # Pick the largest divisor of N such that b_tile*Sq ~>= 128 matmul rows (MXU fill),
    # while keeping the remaining grid steps available for megacore parallelism.
    if b_tile is None:
        target = max(1, -(-128 // Sq))                   # ceil(128 / Sq)
        b_tile = 1
        for d in range(1, N + 1):
            if N % d == 0 and d <= target:
                b_tile = d
    assert N % b_tile == 0
    num_tiles = N // b_tile

    bf16 = jnp.bfloat16
    eye_h = jnp.eye(heads, dtype=jnp.float32)
    # nn.Linear stores weight as (out, in) and computes x @ W.T; fold the shared per-head
    # projection into one block-diagonal (E, E) weight so the kernel does a single matmul.
    wq_bd = jnp.kron(eye_h, params["Wq"].T).astype(bf16)
    wk_bd = jnp.kron(eye_h, params["Wk"].T).astype(bf16)
    wv_bd = jnp.kron(eye_h, params["Wv"].T).astype(bf16)
    wfc_h = params["Wfc"].T.reshape(heads, D, E).astype(bf16)   # per-head rows of fc_out

    weight_args = (
        wq_bd, wk_bd, wv_bd, wfc_h,
        params["ln1g"].reshape(1, E), params["ln1b"].reshape(1, E),
        params["ln2g"].reshape(1, E), params["ln2b"].reshape(1, E),
        params["W1"].T.astype(bf16), params["b1"].reshape(1, Hff),
        params["W2"].T.astype(bf16), params["b2"].reshape(1, E),
    )

    def wspec(shape):
        return pl.BlockSpec(shape, lambda b, _n=len(shape): (0,) * _n)

    grid_spec = pltpu.PrefetchScalarGridSpec(
        num_scalar_prefetch=0,
        grid=(num_tiles,),
        in_specs=[
            pl.BlockSpec((b_tile, Sv, E), lambda b: (b, 0, 0)),
            pl.BlockSpec((b_tile, Sk, E), lambda b: (b, 0, 0)),
            pl.BlockSpec((b_tile, Sq, E), lambda b: (b, 0, 0)),
            pl.BlockSpec((b_tile, Sq, Sk), lambda b: (b, 0, 0)),
            wspec((E, E)), wspec((E, E)), wspec((E, E)), wspec((heads, D, E)),
            wspec((1, E)), wspec((1, E)), wspec((1, E)), wspec((1, E)),
            wspec((E, Hff)), wspec((1, Hff)), wspec((Hff, E)), wspec((1, E)),
        ],
        out_specs=[
            pl.BlockSpec((b_tile, Sq, E), lambda b: (b, 0, 0)),
            pl.BlockSpec((b_tile, heads, Sq, Sk), lambda b: (b, 0, 0, 0)),
        ],
    )

    out_shapes = (
        jax.ShapeDtypeStruct((N, Sq, E), jnp.float32),
        # TODO(synk): emit bf16 here to halve the attention-prob HBM writeback when the
        # consumer tolerates it; f32 kept to match the PyTorch module's return dtype.
        jax.ShapeDtypeStruct((N, heads, Sq, Sk), jnp.float32),
    )

    return pl.pallas_call(
        encoder_block_kernel,
        out_shape=out_shapes,
        grid_spec=grid_spec,
        compiler_params=pltpu.CompilerParams(dimension_semantics=("parallel",)),
    )(values, keys, query, mask, *weight_args)


def encoder_block_reference(values, keys, query, mask, p, heads, matmul_dtype=jnp.float32):
    """Pure-JAX mirror of the PyTorch forward (eval mode).

    `matmul_dtype=jnp.bfloat16` mirrors the kernel's bf16 matmul operands
    (f32 accumulation) so the comparison can be tight.
    """
    N, Sq, E = query.shape
    D = E // heads
    dt = matmul_dtype
    f32 = jnp.float32

    def mm(a, b, eq):
        return jnp.einsum(eq, a.astype(dt), b.astype(dt), preferred_element_type=f32)

    v4 = values.reshape(N, -1, heads, D)
    k4 = keys.reshape(N, -1, heads, D)
    q4 = query.reshape(N, -1, heads, D)
    vp = mm(v4, p["Wv"].T, "bshd,de->bshe")
    kp = mm(k4, p["Wk"].T, "bshd,de->bshe")
    qp = mm(q4, p["Wq"].T, "bshd,de->bshe")

    energy = mm(qp, kp, "bqhd,bkhd->bhqk")
    energy = jnp.where(mask[:, None, :, :] == 0, jnp.float32(-1e4), energy)
    scaled = energy / jnp.sqrt(jnp.float32(D))
    m = jnp.max(scaled, axis=-1, keepdims=True)
    pr = jnp.exp(scaled - m)
    attn = pr / jnp.sum(pr, axis=-1, keepdims=True)

    ctx = mm(attn, vp, "bhqk,bkhd->bqhd").reshape(N, Sq, E)
    attn_out = mm(ctx, p["Wfc"].T, "bqe,ef->bqf")

    def ln(x, g, b):
        mu = x.mean(-1, keepdims=True)
        var = ((x - mu) ** 2).mean(-1, keepdims=True)
        return (x - mu) / jnp.sqrt(var + 1e-5) * g + b

    x = ln(attn_out, p["ln1g"], p["ln1b"]) + query
    hdn = jnp.maximum(mm(x, p["W1"].T, "bqe,ef->bqf") + p["b1"], 0.0)
    ff = mm(hdn, p["W2"].T, "bqf,fe->bqe") + p["b2"]
    out = ln(ff, p["ln2g"], p["ln2b"]) + x
    return out, attn


if __name__ == "__main__":
    # Small config: batch=2, seq=8, embed=32, heads=4, forward_expansion=4.
    N, S, E, heads, expansion = 2, 8, 32, 4, 4
    D = E // heads
    Hff = E * expansion

    key = jax.random.PRNGKey(0)
    ks = jax.random.split(key, 12)

    values = jax.random.normal(ks[0], (N, S, E), jnp.float32)
    keys_in = jax.random.normal(ks[1], (N, S, E), jnp.float32)
    query = jax.random.normal(ks[2], (N, S, E), jnp.float32)
    mask = (jax.random.uniform(ks[3], (N, S, S)) > 0.3).astype(jnp.float32)

    params = {
        "Wq": 0.1 * jax.random.normal(ks[4], (D, D), jnp.float32),
        "Wk": 0.1 * jax.random.normal(ks[5], (D, D), jnp.float32),
        "Wv": 0.1 * jax.random.normal(ks[6], (D, D), jnp.float32),
        "Wfc": 0.1 * jax.random.normal(ks[7], (E, E), jnp.float32),
        "ln1g": jnp.ones((E,), jnp.float32),
        "ln1b": jnp.zeros((E,), jnp.float32),
        "ln2g": jnp.ones((E,), jnp.float32),
        "ln2b": jnp.zeros((E,), jnp.float32),
        "W1": 0.1 * jax.random.normal(ks[8], (Hff, E), jnp.float32),
        "b1": 0.05 * jax.random.normal(ks[9], (Hff,), jnp.float32),
        "W2": 0.1 * jax.random.normal(ks[10], (E, Hff), jnp.float32),
        "b2": 0.05 * jax.random.normal(ks[11], (E,), jnp.float32),
    }

    out, cross_attn = encoder_block(values, keys_in, query, mask, params, heads)
    jax.block_until_ready((out, cross_attn))

    assert out.shape == (N, S, E) and cross_attn.shape == (N, heads, S, S)

    # Tight check against a reference using the same bf16 matmul operands / f32 accumulation.
    out_bf, attn_bf = encoder_block_reference(
        values, keys_in, query, mask, params, heads, matmul_dtype=jnp.bfloat16)
    assert jnp.allclose(out, out_bf, atol=2e-3, rtol=2e-3), "output mismatch (bf16 reference)"
    assert jnp.allclose(cross_attn, attn_bf, atol=2e-3, rtol=2e-3), "attention mismatch (bf16 reference)"

    # Loose sanity check against the full-f32 reference (bf16 matmul rounding is the only delta).
    out_f32, attn_f32 = encoder_block_reference(values, keys_in, query, mask, params, heads)
    assert jnp.allclose(out, out_f32, atol=1e-1, rtol=1e-1), "output mismatch (f32 reference)"
    assert jnp.allclose(cross_attn, attn_f32, atol=5e-2, rtol=5e-2), "attention mismatch (f32 reference)"

    print("KERNEL_OK")
</pallas_src>

<mosaic_0001>
module attributes {stable_mosaic.version = 11 : i64} {
  func.func @encoder_block_kernel(%arg0: i32, %arg1: memref<2x8x32xf32, #tpu.memory_space<vmem>>, %arg2: memref<2x8x32xf32, #tpu.memory_space<vmem>>, %arg3: memref<2x8x32xf32, #tpu.memory_space<vmem>>, %arg4: memref<2x8x8xf32, #tpu.memory_space<vmem>>, %arg5: memref<32x32xbf16, #tpu.memory_space<vmem>>, %arg6: memref<32x32xbf16, #tpu.memory_space<vmem>>, %arg7: memref<32x32xbf16, #tpu.memory_space<vmem>>, %arg8: memref<4x8x32xbf16, #tpu.memory_space<vmem>>, %arg9: memref<1x32xf32, #tpu.memory_space<vmem>>, %arg10: memref<1x32xf32, #tpu.memory_space<vmem>>, %arg11: memref<1x32xf32, #tpu.memory_space<vmem>>, %arg12: memref<1x32xf32, #tpu.memory_space<vmem>>, %arg13: memref<32x128xbf16, #tpu.memory_space<vmem>>, %arg14: memref<1x128xf32, #tpu.memory_space<vmem>>, %arg15: memref<128x32xbf16, #tpu.memory_space<vmem>>, %arg16: memref<1x32xf32, #tpu.memory_space<vmem>>, %arg17: memref<2x8x32xf32, #tpu.memory_space<vmem>>, %arg18: memref<2x4x8x8xf32, #tpu.memory_space<vmem>>) attributes {dimension_semantics = [#tpu.dimension_semantics<parallel>], iteration_bounds = array<i64: 1>, scalar_prefetch = 0 : i64, scratch_operands = 0 : i64, tpu.core_type = #tpu.core_type<tc>, window_params = [{transform_indices = @transform_0, window_bounds = array<i64: 2, 8, 32>}, {transform_indices = @transform_1, window_bounds = array<i64: 2, 8, 32>}, {transform_indices = @transform_2, window_bounds = array<i64: 2, 8, 32>}, {transform_indices = @transform_3, window_bounds = array<i64: 2, 8, 8>}, {pipeline_mode = #tpu.pipeline_mode<synchronous>, transform_indices = @transform_4, window_bounds = array<i64: 32, 32>}, {pipeline_mode = #tpu.pipeline_mode<synchronous>, transform_indices = @transform_5, window_bounds = array<i64: 32, 32>}, {pipeline_mode = #tpu.pipeline_mode<synchronous>, transform_indices = @transform_6, window_bounds = array<i64: 32, 32>}, {pipeline_mode = #tpu.pipeline_mode<synchronous>, transform_indices = @transform_7, window_bounds = array<i64: 4, 8, 32>}, {pipeline_mode = #tpu.pipeline_mode<synchronous>, transform_indices = @transform_8, window_bounds = array<i64: 1, 32>}, {pipeline_mode = #tpu.pipeline_mode<synchronous>, transform_indices = @transform_9, window_bounds = array<i64: 1, 32>}, {pipeline_mode = #tpu.pipeline_mode<synchronous>, transform_indices = @transform_10, window_bounds = array<i64: 1, 32>}, {pipeline_mode = #tpu.pipeline_mode<synchronous>, transform_indices = @transform_11, window_bounds = array<i64: 1, 32>}, {pipeline_mode = #tpu.pipeline_mode<synchronous>, transform_indices = @transform_12, window_bounds = array<i64: 32, 128>}, {pipeline_mode = #tpu.pipeline_mode<synchronous>, transform_indices = @transform_13, window_bounds = array<i64: 1, 128>}, {pipeline_mode = #tpu.pipeline_mode<synchronous>, transform_indices = @transform_14, window_bounds = array<i64: 128, 32>}, {pipeline_mode = #tpu.pipeline_mode<synchronous>, transform_indices = @transform_15, window_bounds = array<i64: 1, 32>}, {transform_indices = @transform_16, window_bounds = array<i64: 2, 8, 32>}, {transform_indices = @transform_17, window_bounds = array<i64: 2, 4, 8, 8>}]} {
    %cst = arith.constant -1.000000e+04 : f32
    %cst_0 = arith.constant 0.353553385 : f32
    %0 = arith.mulf %cst, %cst_0 : f32
    %c0 = arith.constant 0 : index
    %c0_1 = arith.constant 0 : index
    %c0_2 = arith.constant 0 : index
    %1 = vector.load %arg3[%c0, %c0_1, %c0_2] : memref<2x8x32xf32, #tpu.memory_space<vmem>>, vector<2x8x32xf32>
    %2 = vector.shape_cast %1 : vector<2x8x32xf32> to vector<16x32xf32>
    %c0_3 = arith.constant 0 : index
    %c0_4 = arith.constant 0 : index
    %c0_5 = arith.constant 0 : index
    %3 = vector.load %arg2[%c0_3, %c0_4, %c0_5] : memref<2x8x32xf32, #tpu.memory_space<vmem>>, vector<2x8x32xf32>
    %4 = vector.shape_cast %3 : vector<2x8x32xf32> to vector<16x32xf32>
    %c0_6 = arith.constant 0 : index
    %c0_7 = arith.constant 0 : index
    %c0_8 = arith.constant 0 : index
    %5 = vector.load %arg1[%c0_6, %c0_7, %c0_8] : memref<2x8x32xf32, #tpu.memory_space<vmem>>, vector<2x8x32xf32>
    %6 = vector.shape_cast %5 : vector<2x8x32xf32> to vector<16x32xf32>
    %7 = arith.truncf %2 : vector<16x32xf32> to vector<16x32xbf16>
    %c0_9 = arith.constant 0 : index
    %c0_10 = arith.constant 0 : index
    %8 = vector.load %arg5[%c0_9, %c0_10] : memref<32x32xbf16, #tpu.memory_space<vmem>>, vector<32x32xbf16>
    %cst_11 = arith.constant dense<0.000000e+00> : vector<16x32xf32>
    %9 = tpu.matmul %7, %8, %cst_11 {dimension_numbers = #tpu.dot_dimension_numbers<[1], [0], [0], [1], [0, 0, 1, 1], [], []>} : vector<16x32xbf16>, vector<32x32xbf16>, vector<16x32xf32> -> vector<16x32xf32>
    %10 = vector.shape_cast %9 : vector<16x32xf32> to vector<2x8x32xf32>
    %11 = arith.truncf %4 : vector<16x32xf32> to vector<16x32xbf16>
    %c0_12 = arith.constant 0 : index
    %c0_13 = arith.constant 0 : index
    %12 = vector.load %arg6[%c0_12, %c0_13] : memref<32x32xbf16, #tpu.memory_space<vmem>>, vector<32x32xbf16>
    %cst_14 = arith.constant dense<0.000000e+00> : vector<16x32xf32>
    %13 = tpu.matmul %11, %12, %cst_14 {dimension_numbers = #tpu.dot_dimension_numbers<[1], [0], [0], [1], [0, 0, 1, 1], [], []>} : vector<16x32xbf16>, vector<32x32xbf16>, vector<16x32xf32> -> vector<16x32xf32>
    %14 = vector.shape_cast %13 : vector<16x32xf32> to vector<2x8x32xf32>
    %15 = arith.truncf %6 : vector<16x32xf32> to vector<16x32xbf16>
    %c0_15 = arith.constant 0 : index
    %c0_16 = arith.constant 0 : index
    %16 = vector.load %arg7[%c0_15, %c0_16] : memref<32x32xbf16, #tpu.memory_space<vmem>>, vector<32x32xbf16>
    %cst_17 = arith.constant dense<0.000000e+00> : vector<16x32xf32>
    %17 = tpu.matmul %15, %16, %cst_17 {dimension_numbers = #tpu.dot_dimension_numbers<[1], [0], [0], [1], [0, 0, 1, 1], [], []>} : vector<16x32xbf16>, vector<32x32xbf16>, vector<16x32xf32> -> vector<16x32xf32>
    %18 = vector.shape_cast %17 : vector<16x32xf32> to vector<2x8x32xf32>
    %c0_18 = arith.constant 0 : index
    %c0_19 = arith.constant 0 : index
    %c0_20 = arith.constant 0 : index
    %19 = vector.load %arg4[%c0_18, %c0_19, %c0_20] : memref<2x8x8xf32, #tpu.memory_space<vmem>>, vector<2x8x8xf32>
    %cst_21 = arith.constant 0.000000e+00 : f32
    %20 = vector.broadcast %cst_21 : f32 to vector<2x8x8xf32>
    %21 = arith.cmpf oeq, %19, %20 : vector<2x8x8xf32>
    %cst_22 = arith.constant 0.000000e+00 : f32
    %22 = vector.broadcast %cst_22 : f32 to vector<16x32xf32>
    %23 = vector.extract_strided_slice %10 {offsets = [0, 0, 0], sizes = [2, 8, 8], strides = [1, 1, 1]} : vector<2x8x32xf32> to vector<2x8x8xf32>
    %24 = arith.truncf %23 : vector<2x8x8xf32> to vector<2x8x8xbf16>
    %25 = vector.extract_strided_slice %14 {offsets = [0, 0, 0], sizes = [2, 8, 8], strides = [1, 1, 1]} : vector<2x8x32xf32> to vector<2x8x8xf32>
    %26 = arith.truncf %25 : vector<2x8x8xf32> to vector<2x8x8xbf16>
    %27 = vector.extract_strided_slice %18 {offsets = [0, 0, 0], sizes = [2, 8, 8], strides = [1, 1, 1]} : vector<2x8x32xf32> to vector<2x8x8xf32>
    %28 = arith.truncf %27 : vector<2x8x8xf32> to vector<2x8x8xbf16>
    "tpu.trace_start"() <{level = 10 : i32, message = "bqd,bkd->bqk"}> : () -> ()
    %cst_23 = arith.constant dense<0.000000e+00> : vector<2x8x8xf32>
    %29 = tpu.matmul %24, %26, %cst_23 {dimension_numbers = #tpu.dot_dimension_numbers<[2], [2], [1], [1], [0, 0, 0, 1, 1, 1], [0], [0]>} : vector<2x8x8xbf16>, vector<2x8x8xbf16>, vector<2x8x8xf32> -> vector<2x8x8xf32>
    "tpu.trace_stop"() : () -> ()
    %cst_24 = arith.constant 0.353553385 : f32
    %30 = vector.broadcast %cst_24 : f32 to vector<2x8x8xf32>
    %31 = arith.mulf %29, %30 : vector<2x8x8xf32>
    %32 = vector.broadcast %0 : f32 to vector<2x8x8xf32>
    %33 = arith.select %21, %32, %31 : vector<2x8x8xi1>, vector<2x8x8xf32>
    %cst_25 = arith.constant dense<0xFF800000> : vector<2x8xf32>
    %34 = vector.multi_reduction <maximumf>, %33, %cst_25 [2] : vector<2x8x8xf32> to vector<2x8xf32>
    %35 = vector.shape_cast %34 : vector<2x8xf32> to vector<2x8x1xf32>
    %36 = vector.broadcast %35 : vector<2x8x1xf32> to vector<2x8x8xf32>
    %37 = arith.subf %33, %36 : vector<2x8x8xf32>
    %38 = math.exp %37 : vector<2x8x8xf32>
    %cst_26 = arith.constant dense<0.000000e+00> : vector<2x8xf32>
    %39 = vector.multi_reduction <add>, %38, %cst_26 [2] : vector<2x8x8xf32> to vector<2x8xf32>
    %40 = vector.shape_cast %39 : vector<2x8xf32> to vector<2x8x1xf32>
    %41 = tpu.reciprocal %40 : vector<2x8x1xf32> -> vector<2x8x1xf32>
    %42 = vector.broadcast %41 : vector<2x8x1xf32> to vector<2x8x8xf32>
    %43 = arith.mulf %38, %42 : vector<2x8x8xf32>
    %c0_27 = arith.constant 0 : index
    %c0_28 = arith.constant 0 : index
    %c0_29 = arith.constant 0 : index
    %c0_30 = arith.constant 0 : index
    %44 = vector.load %arg18[%c0_27, %c0_28, %c0_29, %c0_30] : memref<2x4x8x8xf32, #tpu.memory_space<vmem>>, vector<2x1x8x8xf32>
    %45 = vector.shape_cast %44 : vector<2x1x8x8xf32> to vector<2x8x8xf32>
    %46 = vector.shape_cast %43 : vector<2x8x8xf32> to vector<2x1x8x8xf32>
    tpu.vector_store %arg18[%c0_27, %c0_28, %c0_29, %c0_30], %46 {strides = array<i32>} : memref<2x4x8x8xf32, #tpu.memory_space<vmem>>, vector<2x1x8x8xf32>,
    %47 = arith.truncf %43 : vector<2x8x8xf32> to vector<2x8x8xbf16>
    "tpu.trace_start"() <{level = 10 : i32, message = "bqk,bkd->bqd"}> : () -> ()
    %cst_31 = arith.constant dense<0.000000e+00> : vector<2x8x8xf32>
    %48 = tpu.matmul %47, %28, %cst_31 {dimension_numbers = #tpu.dot_dimension_numbers<[2], [1], [1], [2], [0, 0, 0, 1, 1, 2], [0], [0]>} : vector<2x8x8xbf16>, vector<2x8x8xbf16>, vector<2x8x8xf32> -> vector<2x8x8xf32>
    "tpu.trace_stop"() : () -> ()
    %49 = vector.shape_cast %48 : vector<2x8x8xf32> to vector<16x8xf32>
    %50 = arith.truncf %49 : vector<16x8xf32> to vector<16x8xbf16>
    %c0_32 = arith.constant 0 : index
    %c0_33 = arith.constant 0 : index
    %c0_34 = arith.constant 0 : index
    %51 = vector.load %arg8[%c0_32, %c0_33, %c0_34] : memref<4x8x32xbf16, #tpu.memory_space<vmem>>, vector<1x8x32xbf16>
    %52 = vector.shape_cast %51 : vector<1x8x32xbf16> to vector<8x32xbf16>
    %cst_35 = arith.constant dense<0.000000e+00> : vector<16x32xf32>
    %53 = tpu.matmul %50, %52, %cst_35 {dimension_numbers = #tpu.dot_dimension_numbers<[1], [0], [0], [1], [0, 0, 1, 1], [], []>} : vector<16x8xbf16>, vector<8x32xbf16>, vector<16x32xf32> -> vector<16x32xf32>
    %54 = arith.addf %22, %53 : vector<16x32xf32>
    %55 = vector.extract_strided_slice %10 {offsets = [0, 0, 8], sizes = [2, 8, 8], strides = [1, 1, 1]} : vector<2x8x32xf32> to vector<2x8x8xf32>
    %56 = arith.truncf %55 : vector<2x8x8xf32> to vector<2x8x8xbf16>
    %57 = vector.extract_strided_slice %14 {offsets = [0, 0, 8], sizes = [2, 8, 8], strides = [1, 1, 1]} : vector<2x8x32xf32> to vector<2x8x8xf32>
    %58 = arith.truncf %57 : vector<2x8x8xf32> to vector<2x8x8xbf16>
    %59 = vector.extract_strided_slice %18 {offsets = [0, 0, 8], sizes = [2, 8, 8], strides = [1, 1, 1]} : vector<2x8x32xf32> to vector<2x8x8xf32>
    %60 = arith.truncf %59 : vector<2x8x8xf32> to vector<2x8x8xbf16>
    "tpu.trace_start"() <{level = 10 : i32, message = "bqd,bkd->bqk"}> : () -> ()
    %cst_36 = arith.constant dense<0.000000e+00> : vector<2x8x8xf32>
    %61 = tpu.matmul %56, %58, %cst_36 {dimension_numbers = #tpu.dot_dimension_numbers<[2], [2], [1], [1], [0, 0, 0, 1, 1, 1], [0], [0]>} : vector<2x8x8xbf16>, vector<2x8x8xbf16>, vector<2x8x8xf32> -> vector<2x8x8xf32>
    "tpu.trace_stop"() : () -> ()
    %cst_37 = arith.constant 0.353553385 : f32
    %62 = vector.broadcast %cst_37 : f32 to vector<2x8x8xf32>
    %63 = arith.mulf %61, %62 : vector<2x8x8xf32>
    %64 = vector.broadcast %0 : f32 to vector<2x8x8xf32>
    %65 = arith.select %21, %64, %63 : vector<2x8x8xi1>, vector<2x8x8xf32>
    %cst_38 = arith.constant dense<0xFF800000> : vector<2x8xf32>
    %66 = vector.multi_reduction <maximumf>, %65, %cst_38 [2] : vector<2x8x8xf32> to vector<2x8xf32>
    %67 = vector.shape_cast %66 : vector<2x8xf32> to vector<2x8x1xf32>
    %68 = vector.broadcast %67 : vector<2x8x1xf32> to vector<2x8x8xf32>
    %69 = arith.subf %65, %68 : vector<2x8x8xf32>
    %70 = math.exp %69 : vector<2x8x8xf32>
    %cst_39 = arith.constant dense<0.000000e+00> : vector<2x8xf32>
    %71 = vector.multi_reduction <add>, %70, %cst_39 [2] : vector<2x8x8xf32> to vector<2x8xf32>
    %72 = vector.shape_cast %71 : vector<2x8xf32> to vector<2x8x1xf32>
    %73 = tpu.reciprocal %72 : vector<2x8x1xf32> -> vector<2x8x1xf32>
    %74 = vector.broadcast %73 : vector<2x8x1xf32> to vector<2x8x8xf32>
    %75 = arith.mulf %70, %74 : vector<2x8x8xf32>
    %c0_40 = arith.constant 0 : index
    %c1 = arith.constant 1 : index
    %c0_41 = arith.constant 0 : index
    %c0_42 = arith.constant 0 : index
    %76 = vector.load %arg18[%c0_40, %c1, %c0_41, %c0_42] : memref<2x4x8x8xf32, #tpu.memory_space<vmem>>, vector<2x1x8x8xf32>
    %77 = vector.shape_cast %76 : vector<2x1x8x8xf32> to vector<2x8x8xf32>
    %78 = vector.shape_cast %75 : vector<2x8x8xf32> to vector<2x1x8x8xf32>
    tpu.vector_store %arg18[%c0_40, %c1, %c0_41, %c0_42], %78 {strides = array<i32>} : memref<2x4x8x8xf32, #tpu.memory_space<vmem>>, vector<2x1x8x8xf32>,
    %79 = arith.truncf %75 : vector<2x8x8xf32> to vector<2x8x8xbf16>
    "tpu.trace_start"() <{level = 10 : i32, message = "bqk,bkd->bqd"}> : () -> ()
    %cst_43 = arith.constant dense<0.000000e+00> : vector<2x8x8xf32>
    %80 = tpu.matmul %79, %60, %cst_43 {dimension_numbers = #tpu.dot_dimension_numbers<[2], [1], [1], [2], [0, 0, 0, 1, 1, 2], [0], [0]>} : vector<2x8x8xbf16>, vector<2x8x8xbf16>, vector<2x8x8xf32> -> vector<2x8x8xf32>
    "tpu.trace_stop"() : () -> ()
    %81 = vector.shape_cast %80 : vector<2x8x8xf32> to vector<16x8xf32>
    %82 = arith.truncf %81 : vector<16x8xf32> to vector<16x8xbf16>
    %c1_44 = arith.constant 1 : index
    %c0_45 = arith.constant 0 : index
    %c0_46 = arith.constant 0 : index
    %83 = vector.load %arg8[%c1_44, %c0_45, %c0_46] : memref<4x8x32xbf16, #tpu.memory_space<vmem>>, vector<1x8x32xbf16>
    %84 = vector.shape_cast %83 : vector<1x8x32xbf16> to vector<8x32xbf16>
    %cst_47 = arith.constant dense<0.000000e+00> : vector<16x32xf32>
    %85 = tpu.matmul %82, %84, %cst_47 {dimension_numbers = #tpu.dot_dimension_numbers<[1], [0], [0], [1], [0, 0, 1, 1], [], []>} : vector<16x8xbf16>, vector<8x32xbf16>, vector<16x32xf32> -> vector<16x32xf32>
    %86 = arith.addf %54, %85 : vector<16x32xf32>
    %87 = vector.extract_strided_slice %10 {offsets = [0, 0, 16], sizes = [2, 8, 8], strides = [1, 1, 1]} : vector<2x8x32xf32> to vector<2x8x8xf32>
    %88 = arith.truncf %87 : vector<2x8x8xf32> to vector<2x8x8xbf16>
    %89 = vector.extract_strided_slice %14 {offsets = [0, 0, 16], sizes = [2, 8, 8], strides = [1, 1, 1]} : vector<2x8x32xf32> to vector<2x8x8xf32>
    %90 = arith.truncf %89 : vector<2x8x8xf32> to vector<2x8x8xbf16>
    %91 = vector.extract_strided_slice %18 {offsets = [0, 0, 16], sizes = [2, 8, 8], strides = [1, 1, 1]} : vector<2x8x32xf32> to vector<2x8x8xf32>
    %92 = arith.truncf %91 : vector<2x8x8xf32> to vector<2x8x8xbf16>
    "tpu.trace_start"() <{level = 10 : i32, message = "bqd,bkd->bqk"}> : () -> ()
    %cst_48 = arith.constant dense<0.000000e+00> : vector<2x8x8xf32>
    %93 = tpu.matmul %88, %90, %cst_48 {dimension_numbers = #tpu.dot_dimension_numbers<[2], [2], [1], [1], [0, 0, 0, 1, 1, 1], [0], [0]>} : vector<2x8x8xbf16>, vector<2x8x8xbf16>, vector<2x8x8xf32> -> vector<2x8x8xf32>
    "tpu.trace_stop"() : () -> ()
    %cst_49 = arith.constant 0.353553385 : f32
    %94 = vector.broadcast %cst_49 : f32 to vector<2x8x8xf32>
    %95 = arith.mulf %93, %94 : vector<2x8x8xf32>
    %96 = vector.broadcast %0 : f32 to vector<2x8x8xf32>
    %97 = arith.select %21, %96, %95 : vector<2x8x8xi1>, vector<2x8x8xf32>
    %cst_50 = arith.constant dense<0xFF800000> : vector<2x8xf32>
    %98 = vector.multi_reduction <maximumf>, %97, %cst_50 [2] : vector<2x8x8xf32> to vector<2x8xf32>
    %99 = vector.shape_cast %98 : vector<2x8xf32> to vector<2x8x1xf32>
    %100 = vector.broadcast %99 : vector<2x8x1xf32> to vector<2x8x8xf32>
    %101 = arith.subf %97, %100 : vector<2x8x8xf32>
    %102 = math.exp %101 : vector<2x8x8xf32>
    %cst_51 = arith.constant dense<0.000000e+00> : vector<2x8xf32>
    %103 = vector.multi_reduction <add>, %102, %cst_51 [2] : vector<2x8x8xf32> to vector<2x8xf32>
    %104 = vector.shape_cast %103 : vector<2x8xf32> to vector<2x8x1xf32>
    %105 = tpu.reciprocal %104 : vector<2x8x1xf32> -> vector<2x8x1xf32>
    %106 = vector.broadcast %105 : vector<2x8x1xf32> to vector<2x8x8xf32>
    %107 = arith.mulf %102, %106 : vector<2x8x8xf32>
    %c0_52 = arith.constant 0 : index
    %c2 = arith.constant 2 : index
    %c0_53 = arith.constant 0 : index
    %c0_54 = arith.constant 0 : index
    %108 = vector.load %arg18[%c0_52, %c2, %c0_53, %c0_54] : memref<2x4x8x8xf32, #tpu.memory_space<vmem>>, vector<2x1x8x8xf32>
    %109 = vector.shape_cast %108 : vector<2x1x8x8xf32> to vector<2x8x8xf32>
    %110 = vector.shape_cast %107 : vector<2x8x8xf32> to vector<2x1x8x8xf32>
    tpu.vector_store %arg18[%c0_52, %c2, %c0_53, %c0_54], %110 {strides = array<i32>} : memref<2x4x8x8xf32, #tpu.memory_space<vmem>>, vector<2x1x8x8xf32>,
    %111 = arith.truncf %107 : vector<2x8x8xf32> to vector<2x8x8xbf16>
    "tpu.trace_start"() <{level = 10 : i32, message = "bqk,bkd->bqd"}> : () -> ()
    %cst_55 = arith.constant dense<0.000000e+00> : vector<2x8x8xf32>
    %112 = tpu.matmul %111, %92, %cst_55 {dimension_numbers = #tpu.dot_dimension_numbers<[2], [1], [1], [2], [0, 0, 0, 1, 1, 2], [0], [0]>} : vector<2x8x8xbf16>, vector<2x8x8xbf16>, vector<2x8x8xf32> -> vector<2x8x8xf32>
    "tpu.trace_stop"() : () -> ()
    %113 = vector.shape_cast %112 : vector<2x8x8xf32> to vector<16x8xf32>
    %114 = arith.truncf %113 : vector<16x8xf32> to vector<16x8xbf16>
    %c2_56 = arith.constant 2 : index
    %c0_57 = arith.constant 0 : index
    %c0_58 = arith.constant 0 : index
    %115 = vector.load %arg8[%c2_56, %c0_57, %c0_58] : memref<4x8x32xbf16, #tpu.memory_space<vmem>>, vector<1x8x32xbf16>
    %116 = vector.shape_cast %115 : vector<1x8x32xbf16> to vector<8x32xbf16>
    %cst_59 = arith.constant dense<0.000000e+00> : vector<16x32xf32>
    %117 = tpu.matmul %114, %116, %cst_59 {dimension_numbers = #tpu.dot_dimension_numbers<[1], [0], [0], [1], [0, 0, 1, 1], [], []>} : vector<16x8xbf16>, vector<8x32xbf16>, vector<16x32xf32> -> vector<16x32xf32>
    %118 = arith.addf %86, %117 : vector<16x32xf32>
    %119 = vector.extract_strided_slice %10 {offsets = [0, 0, 24], sizes = [2, 8, 8], strides = [1, 1, 1]} : vector<2x8x32xf32> to vector<2x8x8xf32>
    %120 = arith.truncf %119 : vector<2x8x8xf32> to vector<2x8x8xbf16>
    %121 = vector.extract_strided_slice %14 {offsets = [0, 0, 24], sizes = [2, 8, 8], strides = [1, 1, 1]} : vector<2x8x32xf32> to vector<2x8x8xf32>
    %122 = arith.truncf %121 : vector<2x8x8xf32> to vector<2x8x8xbf16>
    %123 = vector.extract_strided_slice %18 {offsets = [0, 0, 24], sizes = [2, 8, 8], strides = [1, 1, 1]} : vector<2x8x32xf32> to vector<2x8x8xf32>
    %124 = arith.truncf %123 : vector<2x8x8xf32> to vector<2x8x8xbf16>
    "tpu.trace_start"() <{level = 10 : i32, message = "bqd,bkd->bqk"}> : () -> ()
    %cst_60 = arith.constant dense<0.000000e+00> : vector<2x8x8xf32>
    %125 = tpu.matmul %120, %122, %cst_60 {dimension_numbers = #tpu.dot_dimension_numbers<[2], [2], [1], [1], [0, 0, 0, 1, 1, 1], [0], [0]>} : vector<2x8x8xbf16>, vector<2x8x8xbf16>, vector<2x8x8xf32> -> vector<2x8x8xf32>
    "tpu.trace_stop"() : () -> ()
    %cst_61 = arith.constant 0.353553385 : f32
    %126 = vector.broadcast %cst_61 : f32 to vector<2x8x8xf32>
    %127 = arith.mulf %125, %126 : vector<2x8x8xf32>
    %128 = vector.broadcast %0 : f32 to vector<2x8x8xf32>
    %129 = arith.select %21, %128, %127 : vector<2x8x8xi1>, vector<2x8x8xf32>
    %cst_62 = arith.constant dense<0xFF800000> : vector<2x8xf32>
    %130 = vector.multi_reduction <maximumf>, %129, %cst_62 [2] : vector<2x8x8xf32> to vector<2x8xf32>
    %131 = vector.shape_cast %130 : vector<2x8xf32> to vector<2x8x1xf32>
    %132 = vector.broadcast %131 : vector<2x8x1xf32> to vector<2x8x8xf32>
    %133 = arith.subf %129, %132 : vector<2x8x8xf32>
    %134 = math.exp %133 : vector<2x8x8xf32>
    %cst_63 = arith.constant dense<0.000000e+00> : vector<2x8xf32>
    %135 = vector.multi_reduction <add>, %134, %cst_63 [2] : vector<2x8x8xf32> to vector<2x8xf32>
    %136 = vector.shape_cast %135 : vector<2x8xf32> to vector<2x8x1xf32>
    %137 = tpu.reciprocal %136 : vector<2x8x1xf32> -> vector<2x8x1xf32>
    %138 = vector.broadcast %137 : vector<2x8x1xf32> to vector<2x8x8xf32>
    %139 = arith.mulf %134, %138 : vector<2x8x8xf32>
    %c0_64 = arith.constant 0 : index
    %c3 = arith.constant 3 : index
    %c0_65 = arith.constant 0 : index
    %c0_66 = arith.constant 0 : index
    %140 = vector.load %arg18[%c0_64, %c3, %c0_65, %c0_66] : memref<2x4x8x8xf32, #tpu.memory_space<vmem>>, vector<2x1x8x8xf32>
    %141 = vector.shape_cast %140 : vector<2x1x8x8xf32> to vector<2x8x8xf32>
    %142 = vector.shape_cast %139 : vector<2x8x8xf32> to vector<2x1x8x8xf32>
    tpu.vector_store %arg18[%c0_64, %c3, %c0_65, %c0_66], %142 {strides = array<i32>} : memref<2x4x8x8xf32, #tpu.memory_space<vmem>>, vector<2x1x8x8xf32>,
    %143 = arith.truncf %139 : vector<2x8x8xf32> to vector<2x8x8xbf16>
    "tpu.trace_start"() <{level = 10 : i32, message = "bqk,bkd->bqd"}> : () -> ()
    %cst_67 = arith.constant dense<0.000000e+00> : vector<2x8x8xf32>
    %144 = tpu.matmul %143, %124, %cst_67 {dimension_numbers = #tpu.dot_dimension_numbers<[2], [1], [1], [2], [0, 0, 0, 1, 1, 2], [0], [0]>} : vector<2x8x8xbf16>, vector<2x8x8xbf16>, vector<2x8x8xf32> -> vector<2x8x8xf32>
    "tpu.trace_stop"() : () -> ()
    %145 = vector.shape_cast %144 : vector<2x8x8xf32> to vector<16x8xf32>
    %146 = arith.truncf %145 : vector<16x8xf32> to vector<16x8xbf16>
    %c3_68 = arith.constant 3 : index
    %c0_69 = arith.constant 0 : index
    %c0_70 = arith.constant 0 : index
    %147 = vector.load %arg8[%c3_68, %c0_69, %c0_70] : memref<4x8x32xbf16, #tpu.memory_space<vmem>>, vector<1x8x32xbf16>
    %148 = vector.shape_cast %147 : vector<1x8x32xbf16> to vector<8x32xbf16>
    %cst_71 = arith.constant dense<0.000000e+00> : vector<16x32xf32>
    %149 = tpu.matmul %146, %148, %cst_71 {dimension_numbers = #tpu.dot_dimension_numbers<[1], [0], [0], [1], [0, 0, 1, 1], [], []>} : vector<16x8xbf16>, vector<8x32xbf16>, vector<16x32xf32> -> vector<16x32xf32>
    %150 = arith.addf %118, %149 : vector<16x32xf32>
    %c0_72 = arith.constant 0 : index
    %c0_73 = arith.constant 0 : index
    %151 = vector.load %arg9[%c0_72, %c0_73] : memref<1x32xf32, #tpu.memory_space<vmem>>, vector<1x32xf32>
    %c0_74 = arith.constant 0 : index
    %c0_75 = arith.constant 0 : index
    %152 = vector.load %arg10[%c0_74, %c0_75] : memref<1x32xf32, #tpu.memory_space<vmem>>, vector<1x32xf32>
    %cst_76 = arith.constant dense<0.000000e+00> : vector<16xf32>
    %153 = vector.multi_reduction <add>, %150, %cst_76 [1] : vector<16x32xf32> to vector<16xf32>
    %154 = vector.shape_cast %153 : vector<16xf32> to vector<16x1xf32>
    %cst_77 = arith.constant 3.200000e+01 : f32
    %155 = vector.broadcast %cst_77 : f32 to vector<16x1xf32>
    %156 = arith.divf %154, %155 : vector<16x1xf32>
    %157 = vector.broadcast %156 : vector<16x1xf32> to vector<16x32xf32>
    %158 = arith.subf %150, %157 : vector<16x32xf32>
    %159 = arith.mulf %158, %158 : vector<16x32xf32>
    %cst_78 = arith.constant dense<0.000000e+00> : vector<16xf32>
    %160 = vector.multi_reduction <add>, %159, %cst_78 [1] : vector<16x32xf32> to vector<16xf32>
    %161 = vector.shape_cast %160 : vector<16xf32> to vector<16x1xf32>
    %cst_79 = arith.constant 3.200000e+01 : f32
    %162 = vector.broadcast %cst_79 : f32 to vector<16x1xf32>
    %163 = arith.divf %161, %162 : vector<16x1xf32>
    %164 = vector.broadcast %156 : vector<16x1xf32> to vector<16x32xf32>
    %165 = arith.subf %150, %164 : vector<16x32xf32>
    %cst_80 = arith.constant 9.99999974E-6 : f32
    %166 = vector.broadcast %cst_80 : f32 to vector<16x1xf32>
    %167 = arith.addf %163, %166 : vector<16x1xf32>
    %168 = math.rsqrt %167 : vector<16x1xf32>
    %169 = vector.broadcast %168 : vector<16x1xf32> to vector<16x32xf32>
    %170 = arith.mulf %165, %169 : vector<16x32xf32>
    %171 = vector.broadcast %151 : vector<1x32xf32> to vector<16x32xf32>
    %172 = arith.mulf %170, %171 : vector<16x32xf32>
    %173 = vector.broadcast %152 : vector<1x32xf32> to vector<16x32xf32>
    %174 = arith.addf %172, %173 : vector<16x32xf32>
    %175 = arith.addf %174, %2 : vector<16x32xf32>
    %176 = arith.truncf %175 : vector<16x32xf32> to vector<16x32xbf16>
    %c0_81 = arith.constant 0 : index
    %c0_82 = arith.constant 0 : index
    %177 = vector.load %arg13[%c0_81, %c0_82] : memref<32x128xbf16, #tpu.memory_space<vmem>>, vector<32x128xbf16>
    %cst_83 = arith.constant dense<0.000000e+00> : vector<16x128xf32>
    %178 = tpu.matmul %176, %177, %cst_83 {dimension_numbers = #tpu.dot_dimension_numbers<[1], [0], [0], [1], [0, 0, 1, 1], [], []>} : vector<16x32xbf16>, vector<32x128xbf16>, vector<16x128xf32> -> vector<16x128xf32>
    %c0_84 = arith.constant 0 : index
    %c0_85 = arith.constant 0 : index
    %179 = vector.load %arg14[%c0_84, %c0_85] : memref<1x128xf32, #tpu.memory_space<vmem>>, vector<1x128xf32>
    %180 = vector.broadcast %179 : vector<1x128xf32> to vector<16x128xf32>
    %181 = arith.addf %178, %180 : vector<16x128xf32>
    %cst_86 = arith.constant 0.000000e+00 : f32
    %182 = vector.broadcast %cst_86 : f32 to vector<16x128xf32>
    %183 = arith.maximumf %181, %182 : vector<16x128xf32>
    %184 = arith.truncf %183 : vector<16x128xf32> to vector<16x128xbf16>
    %c0_87 = arith.constant 0 : index
    %c0_88 = arith.constant 0 : index
    %185 = vector.load %arg15[%c0_87, %c0_88] : memref<128x32xbf16, #tpu.memory_space<vmem>>, vector<128x32xbf16>
    %cst_89 = arith.constant dense<0.000000e+00> : vector<16x32xf32>
    %186 = tpu.matmul %184, %185, %cst_89 {dimension_numbers = #tpu.dot_dimension_numbers<[1], [0], [0], [1], [0, 0, 1, 1], [], []>} : vector<16x128xbf16>, vector<128x32xbf16>, vector<16x32xf32> -> vector<16x32xf32>
    %c0_90 = arith.constant 0 : index
    %c0_91 = arith.constant 0 : index
    %187 = vector.load %arg16[%c0_90, %c0_91] : memref<1x32xf32, #tpu.memory_space<vmem>>, vector<1x32xf32>
    %188 = vector.broadcast %187 : vector<1x32xf32> to vector<16x32xf32>
    %189 = arith.addf %186, %188 : vector<16x32xf32>
    %c0_92 = arith.constant 0 : index
    %c0_93 = arith.constant 0 : index
    %190 = vector.load %arg11[%c0_92, %c0_93] : memref<1x32xf32, #tpu.memory_space<vmem>>, vector<1x32xf32>
    %c0_94 = arith.constant 0 : index
    %c0_95 = arith.constant 0 : index
    %191 = vector.load %arg12[%c0_94, %c0_95] : memref<1x32xf32, #tpu.memory_space<vmem>>, vector<1x32xf32>
    %cst_96 = arith.constant dense<0.000000e+00> : vector<16xf32>
    %192 = vector.multi_reduction <add>, %189, %cst_96 [1] : vector<16x32xf32> to vector<16xf32>
    %193 = vector.shape_cast %192 : vector<16xf32> to vector<16x1xf32>
    %cst_97 = arith.constant 3.200000e+01 : f32
    %194 = vector.broadcast %cst_97 : f32 to vector<16x1xf32>
    %195 = arith.divf %193, %194 : vector<16x1xf32>
    %196 = vector.broadcast %195 : vector<16x1xf32> to vector<16x32xf32>
    %197 = arith.subf %189, %196 : vector<16x32xf32>
    %198 = arith.mulf %197, %197 : vector<16x32xf32>
    %cst_98 = arith.constant dense<0.000000e+00> : vector<16xf32>
    %199 = vector.multi_reduction <add>, %198, %cst_98 [1] : vector<16x32xf32> to vector<16xf32>
    %200 = vector.shape_cast %199 : vector<16xf32> to vector<16x1xf32>
    %cst_99 = arith.constant 3.200000e+01 : f32
    %201 = vector.broadcast %cst_99 : f32 to vector<16x1xf32>
    %202 = arith.divf %200, %201 : vector<16x1xf32>
    %203 = vector.broadcast %195 : vector<16x1xf32> to vector<16x32xf32>
    %204 = arith.subf %189, %203 : vector<16x32xf32>
    %cst_100 = arith.constant 9.99999974E-6 : f32
    %205 = vector.broadcast %cst_100 : f32 to vector<16x1xf32>
    %206 = arith.addf %202, %205 : vector<16x1xf32>
    %207 = math.rsqrt %206 : vector<16x1xf32>
    %208 = vector.broadcast %207 : vector<16x1xf32> to vector<16x32xf32>
    %209 = arith.mulf %204, %208 : vector<16x32xf32>
    %210 = vector.broadcast %190 : vector<1x32xf32> to vector<16x32xf32>
    %211 = arith.mulf %209, %210 : vector<16x32xf32>
    %212 = vector.broadcast %191 : vector<1x32xf32> to vector<16x32xf32>
    %213 = arith.addf %211, %212 : vector<16x32xf32>
    %214 = arith.addf %213, %175 : vector<16x32xf32>
    %215 = vector.shape_cast %214 : vector<16x32xf32> to vector<2x8x32xf32>
    %c0_101 = arith.constant 0 : index
    %c0_102 = arith.constant 0 : index
    %c0_103 = arith.constant 0 : index
    %216 = vector.load %arg17[%c0_101, %c0_102, %c0_103] : memref<2x8x32xf32, #tpu.memory_space<vmem>>, vector<2x8x32xf32>
    tpu.vector_store %arg17[%c0_101, %c0_102, %c0_103], %215 {strides = array<i32>} : memref<2x8x32xf32, #tpu.memory_space<vmem>>, vector<2x8x32xf32>,
    return
  }
  func.func @transform_0(%arg0: i32) -> (i32, i32, i32) {
    %c0_i32 = arith.constant 0 : i32
    %c0_i32_0 = arith.constant 0 : i32
    %c0_i32_1 = arith.constant 0 : i32
    return %arg0, %c0_i32, %c0_i32_0 : i32, i32, i32
  }
  func.func @transform_1(%arg0: i32) -> (i32, i32, i32) {
    %c0_i32 = arith.constant 0 : i32
    %c0_i32_0 = arith.constant 0 : i32
    %c0_i32_1 = arith.constant 0 : i32
    return %arg0, %c0_i32, %c0_i32_0 : i32, i32, i32
  }
  func.func @transform_2(%arg0: i32) -> (i32, i32, i32) {
    %c0_i32 = arith.constant 0 : i32
    %c0_i32_0 = arith.constant 0 : i32
    %c0_i32_1 = arith.constant 0 : i32
    return %arg0, %c0_i32, %c0_i32_0 : i32, i32, i32
  }
  func.func @transform_3(%arg0: i32) -> (i32, i32, i32) {
    %c0_i32 = arith.constant 0 : i32
    %c0_i32_0 = arith.constant 0 : i32
    %c0_i32_1 = arith.constant 0 : i32
    return %arg0, %c0_i32, %c0_i32_0 : i32, i32, i32
  }
  func.func @transform_4(%arg0: i32) -> (i32, i32) {
    %c0_i32 = arith.constant 0 : i32
    %c0_i32_0 = arith.constant 0 : i32
    %c0_i32_1 = arith.constant 0 : i32
    return %c0_i32, %c0_i32_0 : i32, i32
  }
  func.func @transform_5(%arg0: i32) -> (i32, i32) {
    %c0_i32 = arith.constant 0 : i32
    %c0_i32_0 = arith.constant 0 : i32
    %c0_i32_1 = arith.constant 0 : i32
    return %c0_i32, %c0_i32_0 : i32, i32
  }
  func.func @transform_6(%arg0: i32) -> (i32, i32) {
    %c0_i32 = arith.constant 0 : i32
    %c0_i32_0 = arith.constant 0 : i32
    %c0_i32_1 = arith.constant 0 : i32
    return %c0_i32, %c0_i32_0 : i32, i32
  }
  func.func @transform_7(%arg0: i32) -> (i32, i32, i32) {
    %c0_i32 = arith.constant 0 : i32
    %c0_i32_0 = arith.constant 0 : i32
    %c0_i32_1 = arith.constant 0 : i32
    %c0_i32_2 = arith.constant 0 : i32
    return %c0_i32, %c0_i32_0, %c0_i32_1 : i32, i32, i32
  }
  func.func @transform_8(%arg0: i32) -> (i32, i32) {
    %c0_i32 = arith.constant 0 : i32
    %c0_i32_0 = arith.constant 0 : i32
    %c0_i32_1 = arith.constant 0 : i32
    return %c0_i32, %c0_i32_0 : i32, i32
  }
  func.func @transform_9(%arg0: i32) -> (i32, i32) {
    %c0_i32 = arith.constant 0 : i32
    %c0_i32_0 = arith.constant 0 : i32
    %c0_i32_1 = arith.constant 0 : i32
    return %c0_i32, %c0_i32_0 : i32, i32
  }
  func.func @transform_10(%arg0: i32) -> (i32, i32) {
    %c0_i32 = arith.constant 0 : i32
    %c0_i32_0 = arith.constant 0 : i32
    %c0_i32_1 = arith.constant 0 : i32
    return %c0_i32, %c0_i32_0 : i32, i32
  }
  func.func @transform_11(%arg0: i32) -> (i32, i32) {
    %c0_i32 = arith.constant 0 : i32
    %c0_i32_0 = arith.constant 0 : i32
    %c0_i32_1 = arith.constant 0 : i32
    return %c0_i32, %c0_i32_0 : i32, i32
  }
  func.func @transform_12(%arg0: i32) -> (i32, i32) {
    %c0_i32 = arith.constant 0 : i32
    %c0_i32_0 = arith.constant 0 : i32
    %c0_i32_1 = arith.constant 0 : i32
    return %c0_i32, %c0_i32_0 : i32, i32
  }
  func.func @transform_13(%arg0: i32) -> (i32, i32) {
    %c0_i32 = arith.constant 0 : i32
    %c0_i32_0 = arith.constant 0 : i32
    %c0_i32_1 = arith.constant 0 : i32
    return %c0_i32, %c0_i32_0 : i32, i32
  }
  func.func @transform_14(%arg0: i32) -> (i32, i32) {
    %c0_i32 = arith.constant 0 : i32
    %c0_i32_0 = arith.constant 0 : i32
    %c0_i32_1 = arith.constant 0 : i32
    return %c0_i32, %c0_i32_0 : i32, i32
  }
  func.func @transform_15(%arg0: i32) -> (i32, i32) {
    %c0_i32 = arith.constant 0 : i32
    %c0_i32_0 = arith.constant 0 : i32
    %c0_i32_1 = arith.constant 0 : i32
    return %c0_i32, %c0_i32_0 : i32, i32
  }
  func.func @transform_16(%arg0: i32) -> (i32, i32, i32) {
    %c0_i32 = arith.constant 0 : i32
    %c0_i32_0 = arith.constant 0 : i32
    %c0_i32_1 = arith.constant 0 : i32
    return %arg0, %c0_i32, %c0_i32_0 : i32, i32, i32
  }
  func.func @transform_17(%arg0: i32) -> (i32, i32, i32, i32) {
    %c0_i32 = arith.constant 0 : i32
    %c0_i32_0 = arith.constant 0 : i32
    %c0_i32_1 = arith.constant 0 : i32
    %c0_i32_2 = arith.constant 0 : i32
    return %arg0, %c0_i32, %c0_i32_0, %c0_i32_1 : i32, i32, i32, i32
  }
}

</mosaic_0001>

<llo_original>
// kernel: tpu_custom_call.1
$region0: #{tpu_custom_call.1}
  #allocation0 [shape = 'u32[]', space=smem, size = 0x4, offset = 0x4, fixed_abs, tag = 'smem constant byte address 0x4 - core index']
  #allocation1 [shape = 'u32[72,128]{1,0:T(1,128)}', space=vmem, size = 0x9000, scoped, tag = 'internal scratch']
  %s0 = inlined_call_operand.vmem [shape: f32[2,8,32], index: 0, kind: input, shape index: {}]
  %s1 = inlined_call_operand.vmem [shape: f32[2,8,32], index: 1, kind: input, shape index: {}]
  %s2 = inlined_call_operand.vmem [shape: f32[2,8,32], index: 2, kind: input, shape index: {}]
  %s3 = inlined_call_operand.vmem [shape: f32[2,8,8], index: 3, kind: input, shape index: {}]
  %s4 = inlined_call_operand.vmem [shape: bf16[32,32], index: 4, kind: input, shape index: {}]
  %s5 = inlined_call_operand.hbm [shape: bf16[32,32], index: 5, kind: input, shape index: {}]
  %s6 = inlined_call_operand.hbm [shape: bf16[32,32], index: 6, kind: input, shape index: {}]
  %s7 = inlined_call_operand.hbm [shape: bf16[4,8,32], index: 7, kind: input, shape index: {}]
  %s8 = inlined_call_operand.vmem [shape: f32[1,32], index: 8, kind: input, shape index: {}]
  %s9 = inlined_call_operand.vmem [shape: f32[1,32], index: 9, kind: input, shape index: {}]
  %s10 = inlined_call_operand.vmem [shape: f32[1,32], index: 10, kind: input, shape index: {}]
  %s11 = inlined_call_operand.vmem [shape: f32[1,32], index: 11, kind: input, shape index: {}]
  %s12 = inlined_call_operand.hbm [shape: bf16[32,128], index: 12, kind: input, shape index: {}]
  %s13 = inlined_call_operand.vmem [shape: f32[1,128], index: 13, kind: input, shape index: {}]
  %s14 = inlined_call_operand.vmem [shape: bf16[128,32], index: 14, kind: input, shape index: {}]
  %s15 = inlined_call_operand.vmem [shape: f32[1,32], index: 15, kind: input, shape index: {}]
  %s16 = inlined_call_operand.hbm [shape: f32[2,8,32], index: 16, kind: output, shape index: {0}]
  %s17 = inlined_call_operand.hbm [shape: f32[2,4,8,8], index: 17, kind: output, shape index: {1}]
  %18 = xla_tuple %s16, %s17
  %s19 = sld [smem:[#allocation0]]
  $region98: #{tpu_custom_call.1} parent=0
    _
  %s21 = ssub.s32 1, %s19
  %s22 = scalar_select 0, %s21, %s19
  $region1: #{tpu_custom_call.1} parent=0
    #allocation2 [shape = 'u8[8192]{0}', space=vmem, size = 0x2000, scoped, tag = 'input window, operand 5, single buffered']
    #allocation3 [shape = 's32[1]{0}', space=sflag, size = 0x4, scoped, tag = 'scoped memory for tpu_custom_call.1']
    #allocation4 [shape = 's32[1]{0}', space=sflag, size = 0x4, scoped, tag = 'scoped memory for tpu_custom_call.1']
    #allocation5 [shape = 'u8[8192]{0}', space=vmem, size = 0x2000, scoped, tag = 'input window, operand 6, single buffered']
    #allocation6 [shape = 's32[1]{0}', space=sflag, size = 0x4, scoped, tag = 'scoped memory for tpu_custom_call.1']
    #allocation7 [shape = 'u8[8192]{0}', space=vmem, size = 0x2000, scoped, tag = 'input window, operand 7, single buffered']
    #allocation8 [shape = 'u8[8192]{0}', space=vmem, size = 0x2000, scoped, tag = 'input window, operand 12, single buffered']
    #allocation9 [shape = 's32[1]{0}', space=sflag, size = 0x4, scoped, tag = 'scoped memory for tpu_custom_call.1']
    #allocation10 [shape = 'u8[8192]{0}', space=vmem, size = 0x2000, scoped, tag = 'output window, operand 0, single buffered']
    #allocation11 [shape = 'u8[32768]{0}', space=vmem, size = 0x8000, scoped, tag = 'output window, operand 1, single buffered']
    #allocation12 [shape = 's32[1]{0}', space=sflag, size = 0x4, scoped, tag = 'scoped memory for tpu_custom_call.1']
    %23 = vsyncpa [#allocation3], 0
    %24 = vsyncpa [#allocation6], 0
    %25 = vsyncpa [#allocation9], 0
    %26 = vsyncpa [#allocation4], 0
    %27 = vsyncpa [#allocation12], 0
    // Predicated region
    $region2: #{tpu_custom_call.1} parent=1 // pred_check
      _
    $region3: #{tpu_custom_call.1} parent=1 // pred_check_branch
      %29 = sbr.rel (0) target = $region5
    $region4: #{tpu_custom_call.1} parent=1 // pred_region
      _
    $region5: #{tpu_custom_call.1} parent=1 // pred_fallthru
      _
    // Predicated region
    $region6: #{tpu_custom_call.1} parent=1 // pred_check
      _
    $region7: #{tpu_custom_call.1} parent=1 // pred_check_branch
      %31 = sbr.rel (0) target = $region9
    $region8: #{tpu_custom_call.1} parent=1 // pred_region
      _
    $region9: #{tpu_custom_call.1} parent=1 // pred_fallthru
      _
    // Predicated region
    $region10: #{tpu_custom_call.1} parent=1 // pred_check
      _
    $region11: #{tpu_custom_call.1} parent=1 // pred_check_branch
      %33 = sbr.rel (0) target = $region13
    $region12: #{tpu_custom_call.1} parent=1 // pred_region
      _
    $region13: #{tpu_custom_call.1} parent=1 // pred_fallthru
      _
    // Predicated region
    $region14: #{tpu_custom_call.1} parent=1 // pred_check
      _
    $region15: #{tpu_custom_call.1} parent=1 // pred_check_branch
      %35 = sbr.rel (0) target = $region17
    $region16: #{tpu_custom_call.1} parent=1 // pred_region
      _
    $region17: #{tpu_custom_call.1} parent=1 // pred_fallthru
      _
    // Predicated region
    $region18: #{tpu_custom_call.1} parent=1 // pred_check
      _
    $region19: #{tpu_custom_call.1} parent=1 // pred_check_branch
      %37 = sbr.rel (0) target = $region21
    $region20: #{tpu_custom_call.1} parent=1 // pred_region
      _
    $region21: #{tpu_custom_call.1} parent=1 // pred_fallthru
      _
    // Predicated region
    $region22: #{tpu_custom_call.1} parent=1 // pred_check
      _
    $region23: #{tpu_custom_call.1} parent=1 // pred_check_branch
      %39 = sbr.rel (0) target = $region25
    $region24: #{tpu_custom_call.1} parent=1 // pred_region
      %41 = vsyncadd [#allocation3], 0
      %s42 = sshll.u32 %s5, 4
      %s43 = int_to_ptr.hbm [resolvable:$true] %s42
      %s44 = sshll.u32 [#allocation2], 4
      %s45 = int_to_ptr.vmem [resolvable:$true] %s44
      %50 = dma.hbm_to_vmem [thread:$0]  %s43, 256, %s45, [#allocation3], 64, 64, 4
    $region25: #{tpu_custom_call.1} parent=1 // pred_fallthru
      _
    // Predicated region
    $region26: #{tpu_custom_call.1} parent=1 // pred_check
      _
    $region27: #{tpu_custom_call.1} parent=1 // pred_check_branch
      %52 = sbr.rel (0) target = $region29
    $region28: #{tpu_custom_call.1} parent=1 // pred_region
      %54 = vsyncadd [#allocation6], 0
      %s55 = sshll.u32 %s6, 4
      %s56 = int_to_ptr.hbm [resolvable:$true] %s55
      %s57 = sshll.u32 [#allocation5], 4
      %s58 = int_to_ptr.vmem [resolvable:$true] %s57
      %63 = dma.hbm_to_vmem [thread:$0]  %s56, 256, %s58, [#allocation6], 64, 64, 4
    $region29: #{tpu_custom_call.1} parent=1 // pred_fallthru
      _
    // Predicated region
    $region30: #{tpu_custom_call.1} parent=1 // pred_check
      _
    $region31: #{tpu_custom_call.1} parent=1 // pred_check_branch
      %65 = sbr.rel (0) target = $region33
    $region32: #{tpu_custom_call.1} parent=1 // pred_region
      %67 = vsyncadd [#allocation6], 0
      %s68 = sshll.u32 %s7, 4
      %s69 = int_to_ptr.hbm [resolvable:$true] %s68
      %s70 = sshll.u32 [#allocation7], 4
      %s71 = int_to_ptr.vmem [resolvable:$true] %s70
      %76 = dma.hbm_to_vmem [thread:$0]  %s69, 256, %s71, [#allocation6], 64, 64, 4
    $region33: #{tpu_custom_call.1} parent=1 // pred_fallthru
      _
    // Predicated region
    $region34: #{tpu_custom_call.1} parent=1 // pred_check
      _
    $region35: #{tpu_custom_call.1} parent=1 // pred_check_branch
      %78 = sbr.rel (0) target = $region37
    $region36: #{tpu_custom_call.1} parent=1 // pred_region
      _
    $region37: #{tpu_custom_call.1} parent=1 // pred_fallthru
      _
    // Predicated region
    $region38: #{tpu_custom_call.1} parent=1 // pred_check
      _
    $region39: #{tpu_custom_call.1} parent=1 // pred_check_branch
      %80 = sbr.rel (0) target = $region41
    $region40: #{tpu_custom_call.1} parent=1 // pred_region
      _
    $region41: #{tpu_custom_call.1} parent=1 // pred_fallthru
      _
    // Predicated region
    $region42: #{tpu_custom_call.1} parent=1 // pred_check
      _
    $region43: #{tpu_custom_call.1} parent=1 // pred_check_branch
      %82 = sbr.rel (0) target = $region45
    $region44: #{tpu_custom_call.1} parent=1 // pred_region
      _
    $region45: #{tpu_custom_call.1} parent=1 // pred_fallthru
      _
    // Predicated region
    $region46: #{tpu_custom_call.1} parent=1 // pred_check
      _
    $region47: #{tpu_custom_call.1} parent=1 // pred_check_branch
      %84 = sbr.rel (0) target = $region49
    $region48: #{tpu_custom_call.1} parent=1 // pred_region
      _
    $region49: #{tpu_custom_call.1} parent=1 // pred_fallthru
      _
    // Predicated region
    $region50: #{tpu_custom_call.1} parent=1 // pred_check
      _
    $region51: #{tpu_custom_call.1} parent=1 // pred_check_branch
      %86 = sbr.rel (0) target = $region53
    $region52: #{tpu_custom_call.1} parent=1 // pred_region
      %88 = vsyncadd [#allocation9], 0
      %s89 = sshll.u32 %s12, 4
      %s90 = int_to_ptr.hbm [resolvable:$true] %s89
      %s91 = sshll.u32 [#allocation8], 4
      %s92 = int_to_ptr.vmem [resolvable:$true] %s91
      %97 = dma.hbm_to_vmem [thread:$0]  %s90, 256, %s92, [#allocation9], 64, 64, 4
    $region53: #{tpu_custom_call.1} parent=1 // pred_fallthru
      _
    // Predicated region
    $region54: #{tpu_custom_call.1} parent=1 // pred_check
      _
    $region55: #{tpu_custom_call.1} parent=1 // pred_check_branch
      %99 = sbr.rel (0) target = $region57
    $region56: #{tpu_custom_call.1} parent=1 // pred_region
      _
    $region57: #{tpu_custom_call.1} parent=1 // pred_fallthru
      _
    // Predicated region
    $region58: #{tpu_custom_call.1} parent=1 // pred_check
      _
    $region59: #{tpu_custom_call.1} parent=1 // pred_check_branch
      %101 = sbr.rel (0) target = $region61
    $region60: #{tpu_custom_call.1} parent=1 // pred_region
      _
    $region61: #{tpu_custom_call.1} parent=1 // pred_fallthru
      _
    // Predicated region
    $region62: #{tpu_custom_call.1} parent=1 // pred_check
      _
    $region63: #{tpu_custom_call.1} parent=1 // pred_check_branch
      %103 = sbr.rel (0) target = $region65
    $region64: #{tpu_custom_call.1} parent=1 // pred_region
      _
    $region65: #{tpu_custom_call.1} parent=1 // pred_fallthru
      _
    // Predicated region
    $region66: #{tpu_custom_call.1} parent=1 // pred_check
      _
    $region67: #{tpu_custom_call.1} parent=1 // pred_check_branch
      %105 = sbr.rel (0) target = $region69
    $region68: #{tpu_custom_call.1} parent=1 // pred_region
      %107 = dma.done [#allocation3], 256
    $region69: #{tpu_custom_call.1} parent=1 // pred_fallthru
      _
    // Predicated region
    $region70: #{tpu_custom_call.1} parent=1 // pred_check
      _
    $region71: #{tpu_custom_call.1} parent=1 // pred_check_branch
      %109 = sbr.rel (0) target = $region73
    $region72: #{tpu_custom_call.1} parent=1 // pred_region
      %111 = dma.done [#allocation6], 256
    $region73: #{tpu_custom_call.1} parent=1 // pred_fallthru
      _
    // Predicated region
    $region74: #{tpu_custom_call.1} parent=1 // pred_check
      _
    $region75: #{tpu_custom_call.1} parent=1 // pred_check_branch
      %113 = sbr.rel (0) target = $region77
    $region76: #{tpu_custom_call.1} parent=1 // pred_region
      %115 = dma.done [#allocation6], 256
    $region77: #{tpu_custom_call.1} parent=1 // pred_fallthru
      _
    // Predicated region
    $region78: #{tpu_custom_call.1} parent=1 // pred_check
      _
    $region79: #{tpu_custom_call.1} parent=1 // pred_check_branch
      %117 = sbr.rel (0) target = $region81
    $region80: #{tpu_custom_call.1} parent=1 // pred_region
      %119 = dma.done [#allocation9], 256
    $region81: #{tpu_custom_call.1} parent=1 // pred_fallthru
      _
    %v121 = vld [vmem:[%s2] sm:$0xff]
    %v122 = vld [vmem:[%s2 + $0x8] sm:$0xff]
    %v123 = vld [vmem:[%s1] sm:$0xff]
    %v124 = vld [vmem:[%s1 + $0x8] sm:$0xff]
    %v125 = vld [vmem:[%s0] sm:$0xff]
    %v126 = vld [vmem:[%s0 + $0x8] sm:$0xff]
    %v127 = vpack.c.bf16 %v122, %v121
    %v128 = vld [vmem:[%s4] sm:$0xf]
    %v129 = vld [vmem:[%s4 + $0x4] sm:$0xf]
    %v130 = vld [vmem:[%s4 + $0x8] sm:$0xf]
    %v131 = vld [vmem:[%s4 + $0xc] sm:$0xf]
    %v136 = vunpack.c.l.b16 %v128
    %v137 = vunpack.c.l.b16 %v129
    %v138 = vunpack.c.l.b16 %v130
    %v139 = vunpack.c.l.b16 %v131
    %v140 = vpack.c.b16 %v137, %v136
    %v141 = vpack.c.b16 %v139, %v138
    %vm144 = vcmask 261120
    %v146 = vsel %vm144, %v127, 0
    %148 = vmatpush.bf16.msra.mxu0 0
    %149 = vmatpush.bf16.msra.mxu0 0
    %150 = vmatpush.bf16.msra.mxu0 0
    %151 = vmatpush.bf16.msra.mxu0 0
    %152 = vmatpush.bf16.msra.mxu0 0
    %153 = vmatpush.bf16.msra.mxu0 0
    %154 = vmatpush.bf16.msra.mxu0 %v141
    %155 = vmatpush.bf16.msra.mxu0 %v140
    %156 = vmatmul.bf16.gmra.mxu0 %v146
    %v157 = vpop.f32.mrf.mxu0
    %v158 = vadd.f32 0.0, %v157
    %v159 = vpop.f32.mrf.mxu0
    %v160 = vadd.f32 0.0, %v159
    %161 = vdwg.mxu0
    %v162 = vpack.c.bf16 %v124, %v123
    %v163 = vld [vmem:[#allocation2] sm:$0xf]
    %v164 = vld [vmem:[#allocation2 + $0x4] sm:$0xf]
    %v165 = vld [vmem:[#allocation2 + $0x8] sm:$0xf]
    %v166 = vld [vmem:[#allocation2 + $0xc] sm:$0xf]
    %v171 = vunpack.c.l.b16 %v163
    %v172 = vunpack.c.l.b16 %v164
    %v173 = vunpack.c.l.b16 %v165
    %v174 = vunpack.c.l.b16 %v166
    %v175 = vpack.c.b16 %v172, %v171
    %v176 = vpack.c.b16 %v174, %v173
    %v180 = vsel %vm144, %v162, 0
    %182 = vmatpush.bf16.msra.mxu0 0
    %183 = vmatpush.bf16.msra.mxu0 0
    %184 = vmatpush.bf16.msra.mxu0 0
    %185 = vmatpush.bf16.msra.mxu0 0
    %186 = vmatpush.bf16.msra.mxu0 0
    %187 = vmatpush.bf16.msra.mxu0 0
    %188 = vmatpush.bf16.msra.mxu0 %v176
    %189 = vmatpush.bf16.msra.mxu0 %v175
    %190 = vmatmul.bf16.gmra.mxu0 %v180
    %v191 = vpop.f32.mrf.mxu0
    %v192 = vadd.f32 0.0, %v191
    %v193 = vpop.f32.mrf.mxu0
    %v194 = vadd.f32 0.0, %v193
    %195 = vdwg.mxu0
    %v196 = vpack.c.bf16 %v126, %v125
    %v197 = vld [vmem:[#allocation5] sm:$0xf]
    %v198 = vld [vmem:[#allocation5 + $0x4] sm:$0xf]
    %v199 = vld [vmem:[#allocation5 + $0x8] sm:$0xf]
    %v200 = vld [vmem:[#allocation5 + $0xc] sm:$0xf]
    %v205 = vunpack.c.l.b16 %v197
    %v206 = vunpack.c.l.b16 %v198
    %v207 = vunpack.c.l.b16 %v199
    %v208 = vunpack.c.l.b16 %v200
    %v209 = vpack.c.b16 %v206, %v205
    %v210 = vpack.c.b16 %v208, %v207
    %v214 = vsel %vm144, %v196, 0
    %216 = vmatpush.bf16.msra.mxu0 0
    %217 = vmatpush.bf16.msra.mxu0 0
    %218 = vmatpush.bf16.msra.mxu0 0
    %219 = vmatpush.bf16.msra.mxu0 0
    %220 = vmatpush.bf16.msra.mxu0 0
    %221 = vmatpush.bf16.msra.mxu0 0
    %222 = vmatpush.bf16.msra.mxu0 %v210
    %223 = vmatpush.bf16.msra.mxu0 %v209
    %224 = vmatmul.bf16.gmra.mxu0 %v214
    %v225 = vpop.f32.mrf.mxu0
    %v226 = vadd.f32 0.0, %v225
    %v227 = vpop.f32.mrf.mxu0
    %v228 = vadd.f32 0.0, %v227
    %229 = vdwg.mxu0
    %v230 = vld [vmem:[%s3] sm:$0xff]
    %v231 = vld [vmem:[%s3 + $0x8] sm:$0xff]
    %vm232 = vcmp.eq.f32.partialorder %v230, 0.0
    %vm233 = vcmp.eq.f32.partialorder %v231, 0.0
    %v234 = vpack.c.bf16 %v158, %v158
    %v235 = vpack.c.bf16 %v160, %v160
    %v236 = vpack.c.bf16 %v192, %v192
    %v237 = vpack.c.bf16 %v194, %v194
    %v238 = vpack.c.bf16 %v226, %v226
    %v239 = vpack.c.bf16 %v228, %v228
    %vm240 = vcmask 64512
    %v242 = vsel %vm240, %v234, 0
    %v245 = vsel %vm240, %v236, 0
    %247 = vmatpush.bf16.xpose.msra.mxu0 0
    %248 = vmatpush.bf16.xpose.msra.mxu0 0
    %249 = vmatpush.bf16.xpose.msra.mxu0 0
    %250 = vmatpush.bf16.xpose.msra.mxu0 0
    %251 = vmatpush.bf16.xpose.msra.mxu0 0
    %252 = vmatpush.bf16.xpose.msra.mxu0 0
    %253 = vmatpush.bf16.xpose.msra.mxu0 0
    %254 = vmatpush.bf16.xpose.msra.mxu0 %v245
    %255 = vmatmul.bf16.gmra.mxu0 %v242
    %v256 = vpop.f32.mrf.mxu0
    %v257 = vadd.f32 0.0, %v256
    %v258 = vpop.f32.mrf.mxu0
    %259 = vdwg.mxu0
    %v261 = vsel %vm240, %v235, 0
    %v264 = vsel %vm240, %v237, 0
    %266 = vmatpush.bf16.xpose.msra.mxu0 0
    %267 = vmatpush.bf16.xpose.msra.mxu0 0
    %268 = vmatpush.bf16.xpose.msra.mxu0 0
    %269 = vmatpush.bf16.xpose.msra.mxu0 0
    %270 = vmatpush.bf16.xpose.msra.mxu0 0
    %271 = vmatpush.bf16.xpose.msra.mxu0 0
    %272 = vmatpush.bf16.xpose.msra.mxu0 0
    %273 = vmatpush.bf16.xpose.msra.mxu0 %v264
    %274 = vmatmul.bf16.gmra.mxu0 %v261
    %v275 = vpop.f32.mrf.mxu0
    %v276 = vadd.f32 0.0, %v275
    %v277 = vpop.f32.mrf.mxu0
    %278 = vdwg.mxu0
    %v279 = vmul.f32 %v257, 0.35355338
    %v280 = vmul.f32 %v276, 0.35355338
    %v281 = vsel %vm232, -3535.534, %v279
    %v282 = vsel %vm233, -3535.534, %v280
    %v283 = vsel %vm240, %v281, -inf
    %284 = vmax.xlane.f32.xlu0 %v283
    %v285 = vpop.xlane.xlu0 %284
    %v286 = vsel %vm240, %v282, -inf
    %287 = vmax.xlane.f32.xlu0 %v286
    %v288 = vpop.xlane.xlu0 %287
    %v289 = vsub.f32 %v281, %v285
    %v290 = vsub.f32 %v282, %v288
    %v291 = vmul.f32 %v289, 1.442695
    %v292 = vpow.pop %v291
    %v293 = vmul.f32 %v290, 1.442695
    %v294 = vpow.pop %v293
    %v295 = vsel %vm240, %v292, 0.0
    %296 = vadd.xlane.f32.xlu0 %v295
    %v297 = vpop.xlane.xlu0 %296
    %v298 = vsel %vm240, %v294, 0.0
    %299 = vadd.xlane.f32.xlu0 %v298
    %v300 = vpop.xlane.xlu0 %299
    %v301 = vrcp.pop %v297
    %v302 = vmul.f32 %v297, %v301
    %v303 = vsub.f32 1.0, %v302
    %v304 = vmul.f32 %v301, %v303
    %v305 = vadd.f32 %v301, %v304
    %vm306 = vweird.f32 %v297
    %vm307 = vweird.f32 %v301
    %vm308 = vmor %vm306, %vm307
    %v309 = vsel %vm308, %v301, %v305
    %v310 = vand.u32 2147483647, %v297
    %vm311 = vcmp.eq.f32.partialorder %v310, 8.507059e+37
    %v312 = vand.u32 %v297, 2147483648
    %v313 = vor.u32 1.1754944e-38, %v312
    %v314 = vsel %vm311, %v313, %v309
    %v315 = vrcp.pop %v300
    %v316 = vmul.f32 %v300, %v315
    %v317 = vsub.f32 1.0, %v316
    %v318 = vmul.f32 %v315, %v317
    %v319 = vadd.f32 %v315, %v318
    %vm320 = vweird.f32 %v300
    %vm321 = vweird.f32 %v315
    %vm322 = vmor %vm320, %vm321
    %v323 = vsel %vm322, %v315, %v319
    %v324 = vand.u32 2147483647, %v300
    %vm325 = vcmp.eq.f32.partialorder %v324, 8.507059e+37
    %v326 = vand.u32 %v300, 2147483648
    %v327 = vor.u32 1.1754944e-38, %v326
    %v328 = vsel %vm325, %v327, %v323
    %v329 = vmul.f32 %v292, %v314
    %v330 = vmul.f32 %v294, %v328
    %331 = vst.msk [vmem:[#allocation11] sm:$0xff] %vm240, %v329
    %332 = vst.msk [vmem:[#allocation11 + $0x20] sm:$0xff] %vm240, %v330
    %v333 = vpack.c.bf16 %v329, %v329
    %v334 = vpack.c.bf16 %v330, %v330
    %v336 = vsel %vm240, %v333, 0
    %vm338 = vcmask 1043456
    %v340 = vsel %vm338, %v238, 0
    %342 = vmatpush.bf16.msra.mxu0 0
    %343 = vmatpush.bf16.msra.mxu0 0
    %344 = vmatpush.bf16.msra.mxu0 0
    %345 = vmatpush.bf16.msra.mxu0 0
    %346 = vmatpush.bf16.msra.mxu0 0
    %347 = vmatpush.bf16.msra.mxu0 0
    %348 = vmatpush.bf16.msra.mxu0 0
    %349 = vmatpush.bf16.msra.mxu0 %v340
    %350 = vmatmul.bf16.gmra.mxu0 %v336
    %v351 = vpop.f32.mrf.mxu0
    %v352 = vadd.f32 0.0, %v351
    %v353 = vpop.f32.mrf.mxu0
    %354 = vdwg.mxu0
    %v356 = vsel %vm240, %v334, 0
    %v359 = vsel %vm338, %v239, 0
    %361 = vmatpush.bf16.msra.mxu0 0
    %362 = vmatpush.bf16.msra.mxu0 0
    %363 = vmatpush.bf16.msra.mxu0 0
    %364 = vmatpush.bf16.msra.mxu0 0
    %365 = vmatpush.bf16.msra.mxu0 0
    %366 = vmatpush.bf16.msra.mxu0 0
    %367 = vmatpush.bf16.msra.mxu0 0
    %368 = vmatpush.bf16.msra.mxu0 %v359
    %369 = vmatmul.bf16.gmra.mxu0 %v356
    %v370 = vpop.f32.mrf.mxu0
    %v371 = vadd.f32 0.0, %v370
    %v372 = vpop.f32.mrf.mxu0
    %373 = vdwg.mxu0
    %v374 = vpack.c.bf16 %v371, %v352
    %v375 = vld [vmem:[#allocation7] sm:$0xf]
    %v377 = vunpack.c.l.b16 %v234
    %v378 = vpack.c.b16 %v377, %v377
    %379 = vrot.lane.b32.xlu0 %v378, 120
    %v380 = vpop.permute.xlu0 %379
    %v382 = vunpack.c.l.b16 %v236
    %v383 = vpack.c.b16 %v382, %v382
    %384 = vrot.lane.b32.xlu0 %v383, 120
    %v385 = vpop.permute.xlu0 %384
    %v387 = vsel %vm240, %v380, 0
    %v390 = vsel %vm240, %v385, 0
    %392 = vmatpush.bf16.xpose.msra.mxu0 0
    %393 = vmatpush.bf16.xpose.msra.mxu0 0
    %394 = vmatpush.bf16.xpose.msra.mxu0 0
    %395 = vmatpush.bf16.xpose.msra.mxu0 0
    %396 = vmatpush.bf16.xpose.msra.mxu0 0
    %397 = vmatpush.bf16.xpose.msra.mxu0 0
    %398 = vmatpush.bf16.xpose.msra.mxu0 0
    %399 = vmatpush.bf16.xpose.msra.mxu0 %v390
    %400 = vmatmul.bf16.gmra.mxu0 %v387
    %v401 = vpop.f32.mrf.mxu0
    %v402 = vadd.f32 0.0, %v401
    %v403 = vpop.f32.mrf.mxu0
    %404 = vdwg.mxu0
    %v406 = vunpack.c.l.b16 %v235
    %v407 = vpack.c.b16 %v406, %v406
    %408 = vrot.lane.b32.xlu0 %v407, 120
    %v409 = vpop.permute.xlu0 %408
    %v411 = vunpack.c.l.b16 %v237
    %v412 = vpack.c.b16 %v411, %v411
    %413 = vrot.lane.b32.xlu0 %v412, 120
    %v414 = vpop.permute.xlu0 %413
    %v416 = vsel %vm240, %v409, 0
    %v419 = vsel %vm240, %v414, 0
    %421 = vmatpush.bf16.xpose.msra.mxu0 0
    %422 = vmatpush.bf16.xpose.msra.mxu0 0
    %423 = vmatpush.bf16.xpose.msra.mxu0 0
    %424 = vmatpush.bf16.xpose.msra.mxu0 0
    %425 = vmatpush.bf16.xpose.msra.mxu0 0
    %426 = vmatpush.bf16.xpose.msra.mxu0 0
    %427 = vmatpush.bf16.xpose.msra.mxu0 0
    %428 = vmatpush.bf16.xpose.msra.mxu0 %v419
    %429 = vmatmul.bf16.gmra.mxu0 %v416
    %v430 = vpop.f32.mrf.mxu0
    %v431 = vadd.f32 0.0, %v430
    %v432 = vpop.f32.mrf.mxu0
    %433 = vdwg.mxu0
    %v434 = vmul.f32 %v402, 0.35355338
    %v435 = vmul.f32 %v431, 0.35355338
    %v436 = vsel %vm232, -3535.534, %v434
    %v437 = vsel %vm233, -3535.534, %v435
    %v438 = vsel %vm240, %v436, -inf
    %439 = vmax.xlane.f32.xlu0 %v438
    %v440 = vpop.xlane.xlu0 %439
    %v441 = vsel %vm240, %v437, -inf
    %442 = vmax.xlane.f32.xlu0 %v441
    %v443 = vpop.xlane.xlu0 %442
    %v444 = vsub.f32 %v436, %v440
    %v445 = vsub.f32 %v437, %v443
    %v446 = vmul.f32 %v444, 1.442695
    %v447 = vpow.pop %v446
    %v448 = vmul.f32 %v445, 1.442695
    %v449 = vpow.pop %v448
    %v450 = vsel %vm240, %v447, 0.0
    %451 = vadd.xlane.f32.xlu0 %v450
    %v452 = vpop.xlane.xlu0 %451
    %v453 = vsel %vm240, %v449, 0.0
    %454 = vadd.xlane.f32.xlu0 %v453
    %v455 = vpop.xlane.xlu0 %454
    %v456 = vrcp.pop %v452
    %v457 = vmul.f32 %v452, %v456
    %v458 = vsub.f32 1.0, %v457
    %v459 = vmul.f32 %v456, %v458
    %v460 = vadd.f32 %v456, %v459
    %vm461 = vweird.f32 %v452
    %vm462 = vweird.f32 %v456
    %vm463 = vmor %vm461, %vm462
    %v464 = vsel %vm463, %v456, %v460
    %v465 = vand.u32 2147483647, %v452
    %vm466 = vcmp.eq.f32.partialorder %v465, 8.507059e+37
    %v467 = vand.u32 %v452, 2147483648
    %v468 = vor.u32 1.1754944e-38, %v467
    %v469 = vsel %vm466, %v468, %v464
    %v470 = vrcp.pop %v455
    %v471 = vmul.f32 %v455, %v470
    %v472 = vsub.f32 1.0, %v471
    %v473 = vmul.f32 %v470, %v472
    %v474 = vadd.f32 %v470, %v473
    %vm475 = vweird.f32 %v455
    %vm476 = vweird.f32 %v470
    %vm477 = vmor %vm475, %vm476
    %v478 = vsel %vm477, %v470, %v474
    %v479 = vand.u32 2147483647, %v455
    %vm480 = vcmp.eq.f32.partialorder %v479, 8.507059e+37
    %v481 = vand.u32 %v455, 2147483648
    %v482 = vor.u32 1.1754944e-38, %v481
    %v483 = vsel %vm480, %v482, %v478
    %v484 = vmul.f32 %v447, %v469
    %v485 = vmul.f32 %v449, %v483
    %s486 = scalar_lea.vmem [#allocation11], 8
    %487 = vst.msk [vmem:[%s486] sm:$0xff] %vm240, %v484
    %488 = vst.msk [vmem:[%s486 + $0x20] sm:$0xff] %vm240, %v485
    %v489 = vpack.c.bf16 %v484, %v484
    %v490 = vpack.c.bf16 %v485, %v485
    %v492 = vunpack.c.l.b16 %v238
    %v493 = vpack.c.b16 %v492, %v492
    %494 = vrot.lane.b32.xlu0 %v493, 120
    %v495 = vpop.permute.xlu0 %494
    %v497 = vsel %vm240, %v489, 0
    %v500 = vsel %vm338, %v495, 0
    %502 = vmatpush.bf16.msra.mxu0 0
    %503 = vmatpush.bf16.msra.mxu0 0
    %504 = vmatpush.bf16.msra.mxu0 0
    %505 = vmatpush.bf16.msra.mxu0 0
    %506 = vmatpush.bf16.msra.mxu0 0
    %507 = vmatpush.bf16.msra.mxu0 0
    %508 = vmatpush.bf16.msra.mxu0 0
    %509 = vmatpush.bf16.msra.mxu0 %v500
    %510 = vmatmul.bf16.gmra.mxu0 %v497
    %v511 = vpop.f32.mrf.mxu0
    %v512 = vadd.f32 0.0, %v511
    %v513 = vpop.f32.mrf.mxu0
    %514 = vdwg.mxu0
    %v516 = vunpack.c.l.b16 %v239
    %v517 = vpack.c.b16 %v516, %v516
    %518 = vrot.lane.b32.xlu0 %v517, 120
    %v519 = vpop.permute.xlu0 %518
    %v521 = vsel %vm240, %v490, 0
    %v524 = vsel %vm338, %v519, 0
    %526 = vmatpush.bf16.msra.mxu0 0
    %527 = vmatpush.bf16.msra.mxu0 0
    %528 = vmatpush.bf16.msra.mxu0 0
    %529 = vmatpush.bf16.msra.mxu0 0
    %530 = vmatpush.bf16.msra.mxu0 0
    %531 = vmatpush.bf16.msra.mxu0 0
    %532 = vmatpush.bf16.msra.mxu0 0
    %533 = vmatpush.bf16.msra.mxu0 %v524
    %534 = vmatmul.bf16.gmra.mxu0 %v521
    %v535 = vpop.f32.mrf.mxu0
    %v536 = vadd.f32 0.0, %v535
    %v537 = vpop.f32.mrf.mxu0
    %538 = vdwg.mxu0
    %v539 = vpack.c.bf16 %v536, %v512
    %s540 = scalar_lea.vmem [#allocation7], 4
    %v541 = vld [vmem:[%s540] sm:$0xf]
    %v543 = vsel %vm240, %v539, 0
    %v546 = vsel %vm338, %v541, 0
    %548 = vmatpush.bf16.msra.mxu0 0
    %549 = vmatpush.bf16.msra.mxu0 0
    %550 = vmatpush.bf16.msra.mxu0 0
    %551 = vmatpush.bf16.msra.mxu0 0
    %552 = vmatpush.bf16.msra.mxu0 0
    %553 = vmatpush.bf16.msra.mxu0 0
    %554 = vmatpush.bf16.msra.mxu0 0
    %555 = vmatpush.bf16.msra.mxu0 %v546
    %556 = vmatmul.bf16.gmra.mxu0 %v543
    %v557 = vpop.f32.mrf.mxu0
    %v558 = vadd.f32 0.0, %v557
    %v559 = vpop.f32.mrf.mxu0
    %v560 = vadd.f32 0.0, %v559
    %561 = vdwg.mxu0
    %v563 = vsel %vm240, %v374, 0
    %v566 = vsel %vm338, %v375, 0
    %568 = vmatpush.bf16.msra.mxu0 0
    %569 = vmatpush.bf16.msra.mxu0 0
    %570 = vmatpush.bf16.msra.mxu0 0
    %571 = vmatpush.bf16.msra.mxu0 0
    %572 = vmatpush.bf16.msra.mxu0 0
    %573 = vmatpush.bf16.msra.mxu0 0
    %574 = vmatpush.bf16.msra.mxu0 0
    %575 = vmatpush.bf16.msra.mxu0 %v566
    %576 = vmatmul.bf16.gmra.mxu0 %v563
    %v577 = vpop.f32.mrf.mxu0
    %v578 = vadd.f32 %v558, %v577
    %v579 = vpop.f32.mrf.mxu0
    %v580 = vadd.f32 %v560, %v579
    %581 = vdwg.mxu0
    %582 = vrot.lane.b32.xlu0 %v378, 112
    %v583 = vpop.permute.xlu0 %582
    %584 = vrot.lane.b32.xlu0 %v383, 112
    %v585 = vpop.permute.xlu0 %584
    %v587 = vsel %vm240, %v583, 0
    %v590 = vsel %vm240, %v585, 0
    %592 = vmatpush.bf16.xpose.msra.mxu0 0
    %593 = vmatpush.bf16.xpose.msra.mxu0 0
    %594 = vmatpush.bf16.xpose.msra.mxu0 0
    %595 = vmatpush.bf16.xpose.msra.mxu0 0
    %596 = vmatpush.bf16.xpose.msra.mxu0 0
    %597 = vmatpush.bf16.xpose.msra.mxu0 0
    %598 = vmatpush.bf16.xpose.msra.mxu0 0
    %599 = vmatpush.bf16.xpose.msra.mxu0 %v590
    %600 = vmatmul.bf16.gmra.mxu0 %v587
    %v601 = vpop.f32.mrf.mxu0
    %v602 = vadd.f32 0.0, %v601
    %v603 = vpop.f32.mrf.mxu0
    %604 = vdwg.mxu0
    %605 = vrot.lane.b32.xlu0 %v407, 112
    %v606 = vpop.permute.xlu0 %605
    %607 = vrot.lane.b32.xlu0 %v412, 112
    %v608 = vpop.permute.xlu0 %607
    %v610 = vsel %vm240, %v606, 0
    %v613 = vsel %vm240, %v608, 0
    %615 = vmatpush.bf16.xpose.msra.mxu0 0
    %616 = vmatpush.bf16.xpose.msra.mxu0 0
    %617 = vmatpush.bf16.xpose.msra.mxu0 0
    %618 = vmatpush.bf16.xpose.msra.mxu0 0
    %619 = vmatpush.bf16.xpose.msra.mxu0 0
    %620 = vmatpush.bf16.xpose.msra.mxu0 0
    %621 = vmatpush.bf16.xpose.msra.mxu0 0
    %622 = vmatpush.bf16.xpose.msra.mxu0 %v613
    %623 = vmatmul.bf16.gmra.mxu0 %v610
    %v624 = vpop.f32.mrf.mxu0
    %v625 = vadd.f32 0.0, %v624
    %v626 = vpop.f32.mrf.mxu0
    %627 = vdwg.mxu0
    %v628 = vmul.f32 %v602, 0.35355338
    %v629 = vmul.f32 %v625, 0.35355338
    %v630 = vsel %vm232, -3535.534, %v628
    %v631 = vsel %vm233, -3535.534, %v629
    %v632 = vsel %vm240, %v630, -inf
    %633 = vmax.xlane.f32.xlu0 %v632
    %v634 = vpop.xlane.xlu0 %633
    %v635 = vsel %vm240, %v631, -inf
    %636 = vmax.xlane.f32.xlu0 %v635
    %v637 = vpop.xlane.xlu0 %636
    %v638 = vsub.f32 %v630, %v634
    %v639 = vsub.f32 %v631, %v637
    %v640 = vmul.f32 %v638, 1.442695
    %v641 = vpow.pop %v640
    %v642 = vmul.f32 %v639, 1.442695
    %v643 = vpow.pop %v642
    %v644 = vsel %vm240, %v641, 0.0
    %645 = vadd.xlane.f32.xlu0 %v644
    %v646 = vpop.xlane.xlu0 %645
    %v647 = vsel %vm240, %v643, 0.0
    %648 = vadd.xlane.f32.xlu0 %v647
    %v649 = vpop.xlane.xlu0 %648
    %v650 = vrcp.pop %v646
    %v651 = vmul.f32 %v646, %v650
    %v652 = vsub.f32 1.0, %v651
    %v653 = vmul.f32 %v650, %v652
    %v654 = vadd.f32 %v650, %v653
    %vm655 = vweird.f32 %v646
    %vm656 = vweird.f32 %v650
    %vm657 = vmor %vm655, %vm656
    %v658 = vsel %vm657, %v650, %v654
    %v659 = vand.u32 2147483647, %v646
    %vm660 = vcmp.eq.f32.partialorder %v659, 8.507059e+37
    %v661 = vand.u32 %v646, 2147483648
    %v662 = vor.u32 1.1754944e-38, %v661
    %v663 = vsel %vm660, %v662, %v658
    %v664 = vrcp.pop %v649
    %v665 = vmul.f32 %v649, %v664
    %v666 = vsub.f32 1.0, %v665
    %v667 = vmul.f32 %v664, %v666
    %v668 = vadd.f32 %v664, %v667
    %vm669 = vweird.f32 %v649
    %vm670 = vweird.f32 %v664
    %vm671 = vmor %vm669, %vm670
    %v672 = vsel %vm671, %v664, %v668
    %v673 = vand.u32 2147483647, %v649
    %vm674 = vcmp.eq.f32.partialorder %v673, 8.507059e+37
    %v675 = vand.u32 %v649, 2147483648
    %v676 = vor.u32 1.1754944e-38, %v675
    %v677 = vsel %vm674, %v676, %v672
    %v678 = vmul.f32 %v641, %v663
    %v679 = vmul.f32 %v643, %v677
    %s680 = scalar_lea.vmem [#allocation11], 16
    %681 = vst.msk [vmem:[%s680] sm:$0xff] %vm240, %v678
    %682 = vst.msk [vmem:[%s680 + $0x20] sm:$0xff] %vm240, %v679
    %v683 = vpack.c.bf16 %v678, %v678
    %v684 = vpack.c.bf16 %v679, %v679
    %685 = vrot.lane.b32.xlu0 %v493, 112
    %v686 = vpop.permute.xlu0 %685
    %v688 = vsel %vm240, %v683, 0
    %v691 = vsel %vm338, %v686, 0
    %693 = vmatpush.bf16.msra.mxu0 0
    %694 = vmatpush.bf16.msra.mxu0 0
    %695 = vmatpush.bf16.msra.mxu0 0
    %696 = vmatpush.bf16.msra.mxu0 0
    %697 = vmatpush.bf16.msra.mxu0 0
    %698 = vmatpush.bf16.msra.mxu0 0
    %699 = vmatpush.bf16.msra.mxu0 0
    %700 = vmatpush.bf16.msra.mxu0 %v691
    %701 = vmatmul.bf16.gmra.mxu0 %v688
    %v702 = vpop.f32.mrf.mxu0
    %v703 = vadd.f32 0.0, %v702
    %v704 = vpop.f32.mrf.mxu0
    %705 = vdwg.mxu0
    %706 = vrot.lane.b32.xlu0 %v517, 112
    %v707 = vpop.permute.xlu0 %706
    %v709 = vsel %vm240, %v684, 0
    %v712 = vsel %vm338, %v707, 0
    %714 = vmatpush.bf16.msra.mxu0 0
    %715 = vmatpush.bf16.msra.mxu0 0
    %716 = vmatpush.bf16.msra.mxu0 0
    %717 = vmatpush.bf16.msra.mxu0 0
    %718 = vmatpush.bf16.msra.mxu0 0
    %719 = vmatpush.bf16.msra.mxu0 0
    %720 = vmatpush.bf16.msra.mxu0 0
    %721 = vmatpush.bf16.msra.mxu0 %v712
    %722 = vmatmul.bf16.gmra.mxu0 %v709
    %v723 = vpop.f32.mrf.mxu0
    %v724 = vadd.f32 0.0, %v723
    %v725 = vpop.f32.mrf.mxu0
    %726 = vdwg.mxu0
    %v727 = vpack.c.bf16 %v724, %v703
    %s728 = scalar_lea.vmem [#allocation7], 8
    %v729 = vld [vmem:[%s728] sm:$0xf]
    %v731 = vsel %vm240, %v727, 0
    %v734 = vsel %vm338, %v729, 0
    %736 = vmatpush.bf16.msra.mxu0 0
    %737 = vmatpush.bf16.msra.mxu0 0
    %738 = vmatpush.bf16.msra.mxu0 0
    %739 = vmatpush.bf16.msra.mxu0 0
    %740 = vmatpush.bf16.msra.mxu0 0
    %741 = vmatpush.bf16.msra.mxu0 0
    %742 = vmatpush.bf16.msra.mxu0 0
    %743 = vmatpush.bf16.msra.mxu0 %v734
    %744 = vmatmul.bf16.gmra.mxu0 %v731
    %v745 = vpop.f32.mrf.mxu0
    %v746 = vadd.f32 0.0, %v745
    %v747 = vpop.f32.mrf.mxu0
    %v748 = vadd.f32 0.0, %v747
    %749 = vdwg.mxu0
    %v750 = vadd.f32 %v578, %v746
    %v751 = vadd.f32 %v580, %v748
    %752 = vrot.lane.b32.xlu0 %v378, 104
    %v753 = vpop.permute.xlu0 %752
    %754 = vrot.lane.b32.xlu0 %v383, 104
    %v755 = vpop.permute.xlu0 %754
    %v757 = vsel %vm240, %v753, 0
    %v760 = vsel %vm240, %v755, 0
    %762 = vmatpush.bf16.xpose.msra.mxu0 0
    %763 = vmatpush.bf16.xpose.msra.mxu0 0
    %764 = vmatpush.bf16.xpose.msra.mxu0 0
    %765 = vmatpush.bf16.xpose.msra.mxu0 0
    %766 = vmatpush.bf16.xpose.msra.mxu0 0
    %767 = vmatpush.bf16.xpose.msra.mxu0 0
    %768 = vmatpush.bf16.xpose.msra.mxu0 0
    %769 = vmatpush.bf16.xpose.msra.mxu0 %v760
    %770 = vmatmul.bf16.gmra.mxu0 %v757
    %v771 = vpop.f32.mrf.mxu0
    %v772 = vadd.f32 0.0, %v771
    %v773 = vpop.f32.mrf.mxu0
    %774 = vdwg.mxu0
    %775 = vrot.lane.b32.xlu0 %v407, 104
    %v776 = vpop.permute.xlu0 %775
    %777 = vrot.lane.b32.xlu0 %v412, 104
    %v778 = vpop.permute.xlu0 %777
    %v780 = vsel %vm240, %v776, 0
    %v783 = vsel %vm240, %v778, 0
    %785 = vmatpush.bf16.xpose.msra.mxu0 0
    %786 = vmatpush.bf16.xpose.msra.mxu0 0
    %787 = vmatpush.bf16.xpose.msra.mxu0 0
    %788 = vmatpush.bf16.xpose.msra.mxu0 0
    %789 = vmatpush.bf16.xpose.msra.mxu0 0
    %790 = vmatpush.bf16.xpose.msra.mxu0 0
    %791 = vmatpush.bf16.xpose.msra.mxu0 0
    %792 = vmatpush.bf16.xpose.msra.mxu0 %v783
    %793 = vmatmul.bf16.gmra.mxu0 %v780
    %v794 = vpop.f32.mrf.mxu0
    %v795 = vadd.f32 0.0, %v794
    %v796 = vpop.f32.mrf.mxu0
    %797 = vdwg.mxu0
    %v798 = vmul.f32 %v772, 0.35355338
    %v799 = vmul.f32 %v795, 0.35355338
    %v800 = vsel %vm232, -3535.534, %v798
    %v801 = vsel %vm233, -3535.534, %v799
    %v802 = vsel %vm240, %v800, -inf
    %803 = vmax.xlane.f32.xlu0 %v802
    %v804 = vpop.xlane.xlu0 %803
    %v805 = vsel %vm240, %v801, -inf
    %806 = vmax.xlane.f32.xlu0 %v805
    %v807 = vpop.xlane.xlu0 %806
    %v808 = vsub.f32 %v800, %v804
    %v809 = vsub.f32 %v801, %v807
    %v810 = vmul.f32 %v808, 1.442695
    %v811 = vpow.pop %v810
    %v812 = vmul.f32 %v809, 1.442695
    %v813 = vpow.pop %v812
    %v814 = vsel %vm240, %v811, 0.0
    %815 = vadd.xlane.f32.xlu0 %v814
    %v816 = vpop.xlane.xlu0 %815
    %v817 = vsel %vm240, %v813, 0.0
    %818 = vadd.xlane.f32.xlu0 %v817
    %v819 = vpop.xlane.xlu0 %818
    %v820 = vrcp.pop %v816
    %v821 = vmul.f32 %v816, %v820
    %v822 = vsub.f32 1.0, %v821
    %v823 = vmul.f32 %v820, %v822
    %v824 = vadd.f32 %v820, %v823
    %vm825 = vweird.f32 %v816
    %vm826 = vweird.f32 %v820
    %vm827 = vmor %vm825, %vm826
    %v828 = vsel %vm827, %v820, %v824
    %v829 = vand.u32 2147483647, %v816
    %vm830 = vcmp.eq.f32.partialorder %v829, 8.507059e+37
    %v831 = vand.u32 %v816, 2147483648
    %v832 = vor.u32 1.1754944e-38, %v831
    %v833 = vsel %vm830, %v832, %v828
    %v834 = vrcp.pop %v819
    %v835 = vmul.f32 %v819, %v834
    %v836 = vsub.f32 1.0, %v835
    %v837 = vmul.f32 %v834, %v836
    %v838 = vadd.f32 %v834, %v837
    %vm839 = vweird.f32 %v819
    %vm840 = vweird.f32 %v834
    %vm841 = vmor %vm839, %vm840
    %v842 = vsel %vm841, %v834, %v838
    %v843 = vand.u32 2147483647, %v819
    %vm844 = vcmp.eq.f32.partialorder %v843, 8.507059e+37
    %v845 = vand.u32 %v819, 2147483648
    %v846 = vor.u32 1.1754944e-38, %v845
    %v847 = vsel %vm844, %v846, %v842
    %v848 = vmul.f32 %v811, %v833
    %v849 = vmul.f32 %v813, %v847
    %s850 = scalar_lea.vmem [#allocation11], 24
    %851 = vst.msk [vmem:[%s850] sm:$0xff] %vm240, %v848
    %852 = vst.msk [vmem:[%s850 + $0x20] sm:$0xff] %vm240, %v849
    %v853 = vpack.c.bf16 %v848, %v848
    %v854 = vpack.c.bf16 %v849, %v849
    %855 = vrot.lane.b32.xlu0 %v493, 104
    %v856 = vpop.permute.xlu0 %855
    %v858 = vsel %vm240, %v853, 0
    %v861 = vsel %vm338, %v856, 0
    %863 = vmatpush.bf16.msra.mxu0 0
    %864 = vmatpush.bf16.msra.mxu0 0
    %865 = vmatpush.bf16.msra.mxu0 0
    %866 = vmatpush.bf16.msra.mxu0 0
    %867 = vmatpush.bf16.msra.mxu0 0
    %868 = vmatpush.bf16.msra.mxu0 0
    %869 = vmatpush.bf16.msra.mxu0 0
    %870 = vmatpush.bf16.msra.mxu0 %v861
    %871 = vmatmul.bf16.gmra.mxu0 %v858
    %v872 = vpop.f32.mrf.mxu0
    %v873 = vadd.f32 0.0, %v872
    %v874 = vpop.f32.mrf.mxu0
    %875 = vdwg.mxu0
    %876 = vrot.lane.b32.xlu0 %v517, 104
    %v877 = vpop.permute.xlu0 %876
    %v879 = vsel %vm240, %v854, 0
    %v882 = vsel %vm338, %v877, 0
    %884 = vmatpush.bf16.msra.mxu0 0
    %885 = vmatpush.bf16.msra.mxu0 0
    %886 = vmatpush.bf16.msra.mxu0 0
    %887 = vmatpush.bf16.msra.mxu0 0
    %888 = vmatpush.bf16.msra.mxu0 0
    %889 = vmatpush.bf16.msra.mxu0 0
    %890 = vmatpush.bf16.msra.mxu0 0
    %891 = vmatpush.bf16.msra.mxu0 %v882
    %892 = vmatmul.bf16.gmra.mxu0 %v879
    %v893 = vpop.f32.mrf.mxu0
    %v894 = vadd.f32 0.0, %v893
    %v895 = vpop.f32.mrf.mxu0
    %896 = vdwg.mxu0
    %v897 = vpack.c.bf16 %v894, %v873
    %s898 = scalar_lea.vmem [#allocation7], 12
    %v899 = vld [vmem:[%s898] sm:$0xf]
    %v901 = vsel %vm240, %v897, 0
    %v904 = vsel %vm338, %v899, 0
    %906 = vmatpush.bf16.msra.mxu0 0
    %907 = vmatpush.bf16.msra.mxu0 0
    %908 = vmatpush.bf16.msra.mxu0 0
    %909 = vmatpush.bf16.msra.mxu0 0
    %910 = vmatpush.bf16.msra.mxu0 0
    %911 = vmatpush.bf16.msra.mxu0 0
    %912 = vmatpush.bf16.msra.mxu0 0
    %913 = vmatpush.bf16.msra.mxu0 %v904
    %914 = vmatmul.bf16.gmra.mxu0 %v901
    %v915 = vpop.f32.mrf.mxu0
    %v916 = vadd.f32 0.0, %v915
    %v917 = vpop.f32.mrf.mxu0
    %v918 = vadd.f32 0.0, %v917
    %919 = vdwg.mxu0
    %v920 = vadd.f32 %v750, %v916
    %v921 = vadd.f32 %v751, %v918
    %v922 = vld [vmem:[%s8] sm:$0x1]
    %v923 = vld [vmem:[%s9] sm:$0x1]
    %v924 = vsel %vm144, %v920, 0.0
    %925 = vadd.xlane.f32.xlu0 %v924
    %v926 = vpop.xlane.xlu0 %925
    %v927 = vsel %vm144, %v921, 0.0
    %928 = vadd.xlane.f32.xlu0 %v927
    %v929 = vpop.xlane.xlu0 %928
    %v930 = vrcp.pop 32.0
    %v931 = vmul.f32 32.0, %v930
    %v932 = vsub.f32 1.0, %v931
    %v933 = vmul.f32 %v930, %v932
    %v934 = vadd.f32 %v930, %v933
    %vm935 = vweird.f32 %v930
    %v936 = vsel %vm935, %v930, %v934
    %v937 = vmul.f32 %v926, %v936
    %v938 = vmul.f32 %v929, %v936
    %v939 = vsub.f32 %v920, %v937
    %v940 = vsub.f32 %v921, %v938
    %v941 = vmul.f32 %v939, %v939
    %v942 = vmul.f32 %v940, %v940
    %v943 = vsel %vm144, %v941, 0.0
    %944 = vadd.xlane.f32.xlu0 %v943
    %v945 = vpop.xlane.xlu0 %944
    %v946 = vsel %vm144, %v942, 0.0
    %947 = vadd.xlane.f32.xlu0 %v946
    %v948 = vpop.xlane.xlu0 %947
    %v949 = vmul.f32 %v945, %v936
    %v950 = vmul.f32 %v948, %v936
    %v951 = vadd.f32 %v949, 1e-05
    %v952 = vadd.f32 %v950, 1e-05
    %v953 = vrsqrt.pop %v951
    %v954 = vmul.f32 %v953, %v951
    %v955 = vmul.f32 %v954, %v953
    %v956 = vmul.f32 0.5, %v955
    %v957 = vsub.f32 1.5, %v956
    %v958 = vmul.f32 %v953, %v957
    %vm959 = vweird.f32 %v951
    %vm960 = vweird.f32 %v953
    %vm961 = vmor %vm959, %vm960
    %v962 = vsel %vm961, %v953, %v958
    %v963 = vrsqrt.pop %v952
    %v964 = vmul.f32 %v963, %v952
    %v965 = vmul.f32 %v964, %v963
    %v966 = vmul.f32 0.5, %v965
    %v967 = vsub.f32 1.5, %v966
    %v968 = vmul.f32 %v963, %v967
    %vm969 = vweird.f32 %v952
    %vm970 = vweird.f32 %v963
    %vm971 = vmor %vm969, %vm970
    %v972 = vsel %vm971, %v963, %v968
    %v973 = vmul.f32 %v939, %v962
    %v974 = vmul.f32 %v940, %v972
    %v976 = vperm.slane %v922, 0
    %v978 = vmul.f32 %v973, %v976
    %v979 = vmul.f32 %v974, %v976
    %v981 = vperm.slane %v923, 0
    %v983 = vadd.f32 %v978, %v981
    %v984 = vadd.f32 %v979, %v981
    %v985 = vadd.f32 %v983, %v121
    %v986 = vadd.f32 %v984, %v122
    %v987 = vpack.c.bf16 %v986, %v985
    %v988 = vld [vmem:[#allocation8] sm:$0xf]
    %v989 = vld [vmem:[#allocation8 + $0x4] sm:$0xf]
    %v990 = vld [vmem:[#allocation8 + $0x8] sm:$0xf]
    %v991 = vld [vmem:[#allocation8 + $0xc] sm:$0xf]
    %v992 = vld [vmem:[%s13] sm:$0x1]
    %v994 = vperm.slane %v992, 0
    %v1000 = vunpack.c.l.b16 %v988
    %v1001 = vunpack.c.l.b16 %v989
    %v1002 = vunpack.c.l.b16 %v990
    %v1003 = vunpack.c.l.b16 %v991
    %v1004 = vpack.c.b16 %v1001, %v1000
    %v1005 = vpack.c.b16 %v1003, %v1002
    %v1009 = vsel %vm144, %v987, 0
    %1011 = vmatpush.bf16.msra.mxu0 0
    %1012 = vmatpush.bf16.msra.mxu0 0
    %1013 = vmatpush.bf16.msra.mxu0 0
    %1014 = vmatpush.bf16.msra.mxu0 0
    %1015 = vmatpush.bf16.msra.mxu0 0
    %1016 = vmatpush.bf16.msra.mxu0 0
    %1017 = vmatpush.bf16.msra.mxu0 %v1005
    %1018 = vmatpush.bf16.msra.mxu0 %v1004
    %1019 = vmatmul.bf16.gmra.mxu0 %v1009
    %v1020 = vpop.f32.mrf.mxu0
    %v1021 = vadd.f32 %v994, %v1020
    %v1022 = vpop.f32.mrf.mxu0
    %v1023 = vadd.f32 %v994, %v1022
    %1024 = vdwg.mxu0
    %v1025 = vmax.f32 %v1021, 0.0
    %v1026 = vmax.f32 %v1023, 0.0
    %v1027 = vpack.c.bf16 %v1026, %v1025
    %v1028 = vld [vmem:[%s14] sm:$0xf]
    %v1029 = vld [vmem:[%s14 + $0x4] sm:$0xf]
    %v1030 = vld [vmem:[%s14 + $0x8] sm:$0xf]
    %v1031 = vld [vmem:[%s14 + $0xc] sm:$0xf]
    %v1032 = vld [vmem:[%s14 + $0x10] sm:$0xf]
    %v1033 = vld [vmem:[%s14 + $0x14] sm:$0xf]
    %v1034 = vld [vmem:[%s14 + $0x18] sm:$0xf]
    %v1035 = vld [vmem:[%s14 + $0x1c] sm:$0xf]
    %v1036 = vld [vmem:[%s14 + $0x20] sm:$0xf]
    %v1037 = vld [vmem:[%s14 + $0x24] sm:$0xf]
    %v1038 = vld [vmem:[%s14 + $0x28] sm:$0xf]
    %v1039 = vld [vmem:[%s14 + $0x2c] sm:$0xf]
    %v1040 = vld [vmem:[%s14 + $0x30] sm:$0xf]
    %v1041 = vld [vmem:[%s14 + $0x34] sm:$0xf]
    %v1042 = vld [vmem:[%s14 + $0x38] sm:$0xf]
    %v1043 = vld [vmem:[%s14 + $0x3c] sm:$0xf]
    %v1044 = vld [vmem:[%s15] sm:$0x1]
    %v1046 = vperm.slane %v1044, 0
    %v1064 = vunpack.c.l.b16 %v1028
    %v1065 = vunpack.c.l.b16 %v1029
    %v1066 = vunpack.c.l.b16 %v1030
    %v1067 = vunpack.c.l.b16 %v1031
    %v1068 = vunpack.c.l.b16 %v1032
    %v1069 = vunpack.c.l.b16 %v1033
    %v1070 = vunpack.c.l.b16 %v1034
    %v1071 = vunpack.c.l.b16 %v1035
    %v1072 = vunpack.c.l.b16 %v1036
    %v1073 = vunpack.c.l.b16 %v1037
    %v1074 = vunpack.c.l.b16 %v1038
    %v1075 = vunpack.c.l.b16 %v1039
    %v1076 = vunpack.c.l.b16 %v1040
    %v1077 = vunpack.c.l.b16 %v1041
    %v1078 = vunpack.c.l.b16 %v1042
    %v1079 = vunpack.c.l.b16 %v1043
    %v1080 = vpack.c.b16 %v1065, %v1064
    %v1081 = vpack.c.b16 %v1067, %v1066
    %v1082 = vpack.c.b16 %v1069, %v1068
    %v1083 = vpack.c.b16 %v1071, %v1070
    %v1084 = vpack.c.b16 %v1073, %v1072
    %v1085 = vpack.c.b16 %v1075, %v1074
    %v1086 = vpack.c.b16 %v1077, %v1076
    %v1087 = vpack.c.b16 %v1079, %v1078
    %1096 = vmatpush.bf16.msra.mxu0 %v1087
    %1097 = vmatpush.bf16.msra.mxu0 %v1086
    %1098 = vmatpush.bf16.msra.mxu0 %v1085
    %1099 = vmatpush.bf16.msra.mxu0 %v1084
    %1100 = vmatpush.bf16.msra.mxu0 %v1083
    %1101 = vmatpush.bf16.msra.mxu0 %v1082
    %1102 = vmatpush.bf16.msra.mxu0 %v1081
    %1103 = vmatpush.bf16.msra.mxu0 %v1080
    %1104 = vmatmul.bf16.gmra.mxu0 %v1027
    %v1105 = vpop.f32.mrf.mxu0
    %v1106 = vadd.f32 %v1046, %v1105
    %v1107 = vpop.f32.mrf.mxu0
    %v1108 = vadd.f32 %v1046, %v1107
    %1109 = vdwg.mxu0
    %v1110 = vld [vmem:[%s10] sm:$0x1]
    %v1111 = vld [vmem:[%s11] sm:$0x1]
    %v1112 = vsel %vm144, %v1106, 0.0
    %1113 = vadd.xlane.f32.xlu0 %v1112
    %v1114 = vpop.xlane.xlu0 %1113
    %v1115 = vsel %vm144, %v1108, 0.0
    %1116 = vadd.xlane.f32.xlu0 %v1115
    %v1117 = vpop.xlane.xlu0 %1116
    %v1118 = vmul.f32 %v1114, %v936
    %v1119 = vmul.f32 %v1117, %v936
    %v1120 = vsub.f32 %v1106, %v1118
    %v1121 = vsub.f32 %v1108, %v1119
    %v1122 = vmul.f32 %v1120, %v1120
    %v1123 = vmul.f32 %v1121, %v1121
    %v1124 = vsel %vm144, %v1122, 0.0
    %1125 = vadd.xlane.f32.xlu0 %v1124
    %v1126 = vpop.xlane.xlu0 %1125
    %v1127 = vsel %vm144, %v1123, 0.0
    %1128 = vadd.xlane.f32.xlu0 %v1127
    %v1129 = vpop.xlane.xlu0 %1128
    %v1130 = vmul.f32 %v1126, %v936
    %v1131 = vmul.f32 %v1129, %v936
    %v1132 = vadd.f32 %v1130, 1e-05
    %v1133 = vadd.f32 %v1131, 1e-05
    %v1134 = vrsqrt.pop %v1132
    %v1135 = vmul.f32 %v1134, %v1132
    %v1136 = vmul.f32 %v1135, %v1134
    %v1137 = vmul.f32 0.5, %v1136
    %v1138 = vsub.f32 1.5, %v1137
    %v1139 = vmul.f32 %v1134, %v1138
    %vm1140 = vweird.f32 %v1132
    %vm1141 = vweird.f32 %v1134
    %vm1142 = vmor %vm1140, %vm1141
    %v1143 = vsel %vm1142, %v1134, %v1139
    %v1144 = vrsqrt.pop %v1133
    %v1145 = vmul.f32 %v1144, %v1133
    %v1146 = vmul.f32 %v1145, %v1144
    %v1147 = vmul.f32 0.5, %v1146
    %v1148 = vsub.f32 1.5, %v1147
    %v1149 = vmul.f32 %v1144, %v1148
    %vm1150 = vweird.f32 %v1133
    %vm1151 = vweird.f32 %v1144
    %vm1152 = vmor %vm1150, %vm1151
    %v1153 = vsel %vm1152, %v1144, %v1149
    %v1154 = vmul.f32 %v1120, %v1143
    %v1155 = vmul.f32 %v1121, %v1153
    %v1157 = vperm.slane %v1110, 0
    %v1159 = vmul.f32 %v1154, %v1157
    %v1160 = vmul.f32 %v1155, %v1157
    %v1162 = vperm.slane %v1111, 0
    %v1164 = vadd.f32 %v1159, %v1162
    %v1165 = vadd.f32 %v1160, %v1162
    %v1166 = vadd.f32 %v1164, %v985
    %v1167 = vadd.f32 %v1165, %v986
    %1168 = vst.msk [vmem:[#allocation10] sm:$0xff] %vm144, %v1166
    %1169 = vst.msk [vmem:[#allocation10 + $0x8] sm:$0xff] %vm144, %v1167
    // Predicated region
    $region82: #{tpu_custom_call.1} parent=1 // pred_check
      _
    $region83: #{tpu_custom_call.1} parent=1 // pred_check_branch
      %1171 = sbr.rel (0) target = $region85
    $region84: #{tpu_custom_call.1} parent=1 // pred_region
      %1173 = vsyncadd [#allocation4], 0
      %s1174 = sshll.u32 [#allocation10], 4
      %s1175 = int_to_ptr.vmem [resolvable:$true] %s1174
      %s1176 = sshll.u32 %s16, 4
      %s1177 = int_to_ptr.hbm [resolvable:$true] %s1176
      %1182 = dma.vmem_to_hbm [thread:$0]  %s1175, 256, %s1177, [#allocation4], 128, 128, 8
    $region85: #{tpu_custom_call.1} parent=1 // pred_fallthru
      _
    // Predicated region
    $region86: #{tpu_custom_call.1} parent=1 // pred_check
      _
    $region87: #{tpu_custom_call.1} parent=1 // pred_check_branch
      %1184 = sbr.rel (0) target = $region89
    $region88: #{tpu_custom_call.1} parent=1 // pred_region
      %1186 = vsyncadd [#allocation12], 0
      %s1187 = sshll.u32 [#allocation11], 4
      %s1188 = int_to_ptr.vmem [resolvable:$true] %s1187
      %s1189 = sshll.u32 %s17, 4
      %s1190 = int_to_ptr.hbm [resolvable:$true] %s1189
      %1195 = dma.vmem_to_hbm [thread:$0]  %s1188, 1024, %s1190, [#allocation12], 128, 128, 8
    $region89: #{tpu_custom_call.1} parent=1 // pred_fallthru
      _
    // Predicated region
    $region90: #{tpu_custom_call.1} parent=1 // pred_check
      _
    $region91: #{tpu_custom_call.1} parent=1 // pred_check_branch
      %1197 = sbr.rel (0) target = $region93
    $region92: #{tpu_custom_call.1} parent=1 // pred_region
      %1199 = dma.done [#allocation4], 256
    $region93: #{tpu_custom_call.1} parent=1 // pred_fallthru
      _
    // Predicated region
    $region94: #{tpu_custom_call.1} parent=1 // pred_check
      _
    $region95: #{tpu_custom_call.1} parent=1 // pred_check_branch
      %1201 = sbr.rel (0) target = $region97
    $region96: #{tpu_custom_call.1} parent=1 // pred_region
      %1203 = dma.done [#allocation12], 1024
    $region97: #{tpu_custom_call.1} parent=1 // pred_fallthru
      _
    %1204 = vsyncpa [#allocation3], 1
    %1205 = vsyncpa [#allocation6], 1
    %1206 = vsyncpa [#allocation9], 1
    %1207 = vsyncpa [#allocation4], 1
    %1208 = vsyncpa [#allocation12], 1

</llo_original>
